<compile_context>
chip_gen: v7x
topology: tpu7x:2x2x1
jax: 0.10.0
libtpu: 0.0.40
codegen_flags: <defaults>
</compile_context>

<pallas_src>
import jax
import jax.numpy as jnp
from jax.experimental import pallas as pl
from jax.experimental.pallas import tpu as pltpu


# ----------------------------------------------------------------------------
# Kernel body: one (M, tn) output slab, accumulated over the K grid axis.
# ----------------------------------------------------------------------------
def _linear_kernel(x_ref, w_ref, b_ref, o_ref):
    k = pl.program_id(1)

    @pl.when(k == 0)
    def _():
        o_ref[...] = jnp.zeros_like(o_ref)

    # bf16 (or f32) tiles go straight to the MXU; accumulate in f32 directly in
    # the resident output block -- no in-kernel dtype casts, no acc scratch.
    o_ref[...] += jnp.dot(
        x_ref[...], w_ref[...], preferred_element_type=jnp.float32
    )

    @pl.when(k == pl.num_programs(1) - 1)
    def _():
        o_ref[...] += b_ref[...]


# ----------------------------------------------------------------------------
# Hardware query (conservative fallbacks so this never crashes off-TPU).
# ----------------------------------------------------------------------------
def _tpu_info():
    """Returns (vmem_capacity_bytes, num_tensorcores_per_chip)."""
    vmem_cap = 64 << 20  # v7x has the smallest VMEM; safe default
    try:
        cap = getattr(pltpu.get_tpu_info(), "vmem_capacity_bytes", None)
        if cap:
            vmem_cap = int(cap)
    except Exception:
        pass
    two_tc = False
    try:
        two_tc = "v7" in jax.devices()[0].device_kind.lower()
    except Exception:
        pass
    return vmem_cap, (2 if two_tc else 1)


# ----------------------------------------------------------------------------
# Wrapper:  y = x @ w_t + b      (w_t is (K, N), i.e. PyTorch weight transposed)
# ----------------------------------------------------------------------------
def linear_pallas(x, w_t, b, *, tk=None, tn=None):
    M, K = x.shape
    Kw, N = w_t.shape
    assert K == Kw and b.shape == (1, N)

    # One-time activation cast in the wrapper (x is tiny), never per grid step.
    if x.dtype != w_t.dtype:
        x = x.astype(w_t.dtype)

    vmem_cap, num_cores = _tpu_info()

    # --- N tile: full width on single-TC chips (contiguous W DMA, lane-dense
    # output); split in exactly two "parallel" blocks on v7x so both
    # TensorCores share the weight stream.
    if tn is None:
        if num_cores >= 2 and N % 256 == 0 and (N // 2) % 128 == 0:
            tn = N // 2
        else:
            tn = N
    assert N % tn == 0 and (tn % 128 == 0 or tn == N)

    # --- K tile: target ~8-16 MiB per weight buffer (dominant HBM stream),
    # multiple of 256.  Prefer a divisor of K; otherwise zero-pad K up.
    if tk is None:
        target_w_bytes = min(max(vmem_cap // 8, 8 << 20), 16 << 20)
        tk = max(256, (target_w_bytes // (tn * w_t.dtype.itemsize)) // 256 * 256)
    if K <= tk:
        tk = K
    elif K % tk != 0:
        cand, t = None, 256
        while t <= tk:
            if K % t == 0:
                cand = t
            t += 256
        if cand is not None and cand * 2 >= tk:
            tk = cand
        else:
            k_pad = -(-K // tk) * tk
            x = jnp.pad(x, ((0, 0), (0, k_pad - K)))
            w_t = jnp.pad(w_t, ((0, k_pad - K), (0, 0)))
            K = k_pad
    assert K % tk == 0

    grid = (N // tn, K // tk)  # reduction (K) axis last

    # --- VMEM budget: double-buffered tiles + resident f32 output block.
    need = (
        2 * M * tk * x.dtype.itemsize
        + 2 * tk * tn * w_t.dtype.itemsize
        + 2 * tn * b.dtype.itemsize
        + 2 * M * tn * 4
    )
    vmem_limit = max(int(1.3 * need) + (4 << 20), 32 << 20)
    vmem_limit = min(vmem_limit, int(0.78 * vmem_cap))

    cost = pl.CostEstimate(
        flops=2 * M * K * N,
        transcendentals=0,
        bytes_accessed=(
            K * N * w_t.dtype.itemsize
            + M * K * x.dtype.itemsize
            + M * N * 4
            + N * b.dtype.itemsize
        ),
    )

    return pl.pallas_call(
        _linear_kernel,
        out_shape=jax.ShapeDtypeStruct((M, N), jnp.float32),
        grid_spec=pltpu.PrefetchScalarGridSpec(
            num_scalar_prefetch=0,
            grid=grid,
            in_specs=[
                pl.BlockSpec((M, tk), lambda j, k: (0, k)),   # x slab
                pl.BlockSpec((tk, tn), lambda j, k: (k, j)),  # weight tile
                pl.BlockSpec((1, tn), lambda j, k: (0, j)),   # bias tile
            ],
            out_specs=pl.BlockSpec((M, tn), lambda j, k: (0, j)),
        ),
        compiler_params=pltpu.CompilerParams(
            dimension_semantics=("parallel", "arbitrary"),
            vmem_limit_bytes=vmem_limit,
        ),
        cost_estimate=cost,
    )(x, w_t, b)


# ----------------------------------------------------------------------------
# Module wrapper (JAX/Pallas equivalent of the PyTorch `Embedding` module).
# ----------------------------------------------------------------------------
class EmbeddingPallas:
    def __init__(self, in_features, out_features, key,
                 weight_dtype=jnp.float32, k_quantum=2048):
        kw, kb = jax.random.split(key)
        # PyTorch nn.Linear default init: U(-1/sqrt(fan_in), 1/sqrt(fan_in))
        bound = 1.0 / (in_features ** 0.5)
        w = jax.random.uniform(
            kw, (out_features, in_features), jnp.float32, -bound, bound
        )
        w_t = jnp.transpose(w).astype(weight_dtype)  # (K, N)
        # Pre-pad K ONCE at init (outside jit) so the kernel can use big K
        # tiles even though 128256 = 2^8*3*167 only admits tk in {256, 768}.
        k_pad = -(-in_features // k_quantum) * k_quantum
        if k_pad != in_features:
            w_t = jnp.pad(w_t, ((0, k_pad - in_features), (0, 0)))
        self.in_features = in_features
        self.w_t = w_t
        self.b = jax.random.uniform(
            kb, (1, out_features), jnp.float32, -bound, bound
        )

    def __call__(self, x):
        k_pad = self.w_t.shape[0]
        if x.shape[1] != k_pad:
            x = jnp.pad(x, ((0, 0), (0, k_pad - x.shape[1])))
        return linear_pallas(x, self.w_t, self.b)


if __name__ == "__main__":
    # Scaled-down dims (real module: in=128256, out=4096); same structure.
    BATCH, IN_FEATURES, OUT_FEATURES = 8, 2048, 512

    key = jax.random.PRNGKey(0)
    k_param, k_x = jax.random.split(key)
    x = jax.random.normal(k_x, (BATCH, IN_FEATURES), jnp.float32)

    # --- f32 weights: bit-faithful to the torch module's dtype --------------
    model = EmbeddingPallas(IN_FEATURES, OUT_FEATURES, k_param,
                            weight_dtype=jnp.float32)
    y = jax.block_until_ready(model(x))
    w_full = model.w_t[:IN_FEATURES].astype(jnp.float32)
    y_ref = x @ w_full + model.b
    assert y.shape == (BATCH, OUT_FEATURES) and y.dtype == jnp.float32
    assert jnp.allclose(y, y_ref, atol=1e-3, rtol=1e-3)

    # --- bf16 weights: half the streamed HBM bytes, f32 accumulation --------
    # Reference uses bf16(x) @ bf16(W) so the comparison is apples-to-apples
    # (the kernel now feeds bf16 operands straight to the MXU).
    model_bf16 = EmbeddingPallas(IN_FEATURES, OUT_FEATURES, k_param,
                                 weight_dtype=jnp.bfloat16)
    y2 = jax.block_until_ready(model_bf16(x))
    x_bf = x.astype(jnp.bfloat16)
    w_bf = model_bf16.w_t[:IN_FEATURES]
    y2_ref = jnp.dot(x_bf, w_bf, preferred_element_type=jnp.float32) + model_bf16.b
    assert jnp.allclose(y2, y2_ref, atol=1e-2, rtol=1e-2)

    print("KERNEL_OK")
</pallas_src>

<mosaic_0001>
module attributes {stable_mosaic.version = 11 : i64} {
  func.func @_linear_kernel(%arg0: i32, %arg1: i32, %arg2: memref<8x2048xf32, #tpu.memory_space<vmem>>, %arg3: memref<2048x512xf32, #tpu.memory_space<vmem>>, %arg4: memref<1x512xf32, #tpu.memory_space<vmem>>, %arg5: memref<8x512xf32, #tpu.memory_space<vmem>>) attributes {dimension_semantics = [#tpu.dimension_semantics<parallel>, #tpu.dimension_semantics<arbitrary>], iteration_bounds = array<i64: 1, 1>, scalar_prefetch = 0 : i64, scratch_operands = 0 : i64, tpu.core_type = #tpu.core_type<tc>, window_params = [{transform_indices = @transform_0, window_bounds = array<i64: 8, 2048>}, {transform_indices = @transform_1, window_bounds = array<i64: 2048, 512>}, {transform_indices = @transform_2, window_bounds = array<i64: 1, 512>}, {transform_indices = @transform_3, window_bounds = array<i64: 8, 512>}]} {
    %c0_i32 = arith.constant 0 : i32
    %0 = arith.cmpi eq, %arg1, %c0_i32 : i32
    %1 = arith.extui %0 : i1 to i32
    %c0_i32_0 = arith.constant 0 : i32
    %2 = arith.cmpi ne, %1, %c0_i32_0 : i32
    scf.if %2 {
      %cst_10 = arith.constant 0.000000e+00 : f32
      %12 = vector.broadcast %cst_10 : f32 to vector<8x512xf32>
      %c0_11 = arith.constant 0 : index
      %c0_12 = arith.constant 0 : index
      %13 = vector.load %arg5[%c0_11, %c0_12] : memref<8x512xf32, #tpu.memory_space<vmem>>, vector<8x512xf32>
      tpu.vector_store %arg5[%c0_11, %c0_12], %12 {strides = array<i32>} : memref<8x512xf32, #tpu.memory_space<vmem>>, vector<8x512xf32>,
    } else {
    }
    %c0 = arith.constant 0 : index
    %c0_1 = arith.constant 0 : index
    %3 = vector.load %arg5[%c0, %c0_1] : memref<8x512xf32, #tpu.memory_space<vmem>>, vector<8x512xf32>
    %c0_2 = arith.constant 0 : index
    %c0_3 = arith.constant 0 : index
    %4 = vector.load %arg2[%c0_2, %c0_3] : memref<8x2048xf32, #tpu.memory_space<vmem>>, vector<8x2048xf32>
    %c0_4 = arith.constant 0 : index
    %c0_5 = arith.constant 0 : index
    %5 = vector.load %arg3[%c0_4, %c0_5] : memref<2048x512xf32, #tpu.memory_space<vmem>>, vector<2048x512xf32>
    %cst = arith.constant dense<0.000000e+00> : vector<8x512xf32>
    %6 = tpu.matmul %4, %5, %cst {dimension_numbers = #tpu.dot_dimension_numbers<[1], [0], [0], [1], [0, 0, 1, 1], [], []>} : vector<8x2048xf32>, vector<2048x512xf32>, vector<8x512xf32> -> vector<8x512xf32>
    %7 = arith.addf %3, %6 : vector<8x512xf32>
    %c0_6 = arith.constant 0 : index
    %c0_7 = arith.constant 0 : index
    %8 = vector.load %arg5[%c0_6, %c0_7] : memref<8x512xf32, #tpu.memory_space<vmem>>, vector<8x512xf32>
    tpu.vector_store %arg5[%c0_6, %c0_7], %7 {strides = array<i32>} : memref<8x512xf32, #tpu.memory_space<vmem>>, vector<8x512xf32>,
    %c0_i32_8 = arith.constant 0 : i32
    %9 = arith.cmpi eq, %arg1, %c0_i32_8 : i32
    %10 = arith.extui %9 : i1 to i32
    %c0_i32_9 = arith.constant 0 : i32
    %11 = arith.cmpi ne, %10, %c0_i32_9 : i32
    scf.if %11 {
      %c0_10 = arith.constant 0 : index
      %c0_11 = arith.constant 0 : index
      %12 = vector.load %arg5[%c0_10, %c0_11] : memref<8x512xf32, #tpu.memory_space<vmem>>, vector<8x512xf32>
      %c0_12 = arith.constant 0 : index
      %c0_13 = arith.constant 0 : index
      %13 = vector.load %arg4[%c0_12, %c0_13] : memref<1x512xf32, #tpu.memory_space<vmem>>, vector<1x512xf32>
      %14 = vector.broadcast %13 : vector<1x512xf32> to vector<8x512xf32>
      %15 = arith.addf %12, %14 : vector<8x512xf32>
      %c0_14 = arith.constant 0 : index
      %c0_15 = arith.constant 0 : index
      %16 = vector.load %arg5[%c0_14, %c0_15] : memref<8x512xf32, #tpu.memory_space<vmem>>, vector<8x512xf32>
      tpu.vector_store %arg5[%c0_14, %c0_15], %15 {strides = array<i32>} : memref<8x512xf32, #tpu.memory_space<vmem>>, vector<8x512xf32>,
    } else {
    }
    return
  }
  func.func @transform_0(%arg0: i32, %arg1: i32) -> (i32, i32) {
    %c0_i32 = arith.constant 0 : i32
    %c0_i32_0 = arith.constant 0 : i32
    return %c0_i32, %arg1 : i32, i32
  }
  func.func @transform_1(%arg0: i32, %arg1: i32) -> (i32, i32) {
    %c0_i32 = arith.constant 0 : i32
    return %arg1, %arg0 : i32, i32
  }
  func.func @transform_2(%arg0: i32, %arg1: i32) -> (i32, i32) {
    %c0_i32 = arith.constant 0 : i32
    %c0_i32_0 = arith.constant 0 : i32
    return %c0_i32, %arg0 : i32, i32
  }
  func.func @transform_3(%arg0: i32, %arg1: i32) -> (i32, i32) {
    %c0_i32 = arith.constant 0 : i32
    %c0_i32_0 = arith.constant 0 : i32
    return %c0_i32, %arg0 : i32, i32
  }
}

</mosaic_0001>

<llo_original>
// kernel: tpu_custom_call.1
$region0: #{tpu_custom_call.1}
  #allocation0 [shape = 'u32[]', space=smem, size = 0x4, offset = 0x4, fixed_abs, tag = 'smem constant byte address 0x4 - core index']
  #allocation1 [shape = 'u32[144,128]{1,0:T(1,128)}', space=vmem, size = 0x12000, scoped, tag = 'internal scratch']
  %s0 = inlined_call_operand.hbm [shape: f32[8,2048], index: 0, kind: input, shape index: {}]
  %s1 = inlined_call_operand.hbm [shape: f32[2048,512], index: 1, kind: input, shape index: {}]
  %s2 = inlined_call_operand.hbm [shape: f32[1,512], index: 2, kind: input, shape index: {}]
  %s3 = inlined_call_operand.hbm [shape: f32[8,512], index: 3, kind: output, shape index: {}]
  %s4 = sld [smem:[#allocation0]]
  $region42: #{tpu_custom_call.1} parent=0
    _
  %s6 = ssub.s32 1, %s4
  %s7 = scalar_select 0, %s6, %s4
  $region1: #{tpu_custom_call.1} parent=0
    #allocation2 [shape = 'u8[65536]{0}', space=vmem, size = 0x10000, scoped, tag = 'input window, operand 0, single buffered']
    #allocation3 [shape = 's32[1]{0}', space=sflag, size = 0x4, scoped, tag = 'scoped memory for tpu_custom_call.1']
    #allocation4 [shape = 's32[1]{0}', space=sflag, size = 0x4, scoped, tag = 'scoped memory for tpu_custom_call.1']
    #allocation5 [shape = 'u8[4194304]{0}', space=vmem, size = 0x400000, scoped, tag = 'input window, operand 1, single buffered']
    #allocation6 [shape = 's32[1]{0}', space=sflag, size = 0x4, scoped, tag = 'scoped memory for tpu_custom_call.1']
    #allocation7 [shape = 'u8[2048]{0}', space=vmem, size = 0x800, scoped, tag = 'input window, operand 2, single buffered']
    #allocation8 [shape = 'u8[16384]{0}', space=vmem, size = 0x4000, scoped, tag = 'output window, operand 0, single buffered']
    %8 = vsyncpa [#allocation3], 0
    %9 = vsyncpa [#allocation6], 0
    %10 = vsyncpa [#allocation4], 0
    // Predicated region
    $region2: #{tpu_custom_call.1} parent=1 // pred_check
      _
    $region3: #{tpu_custom_call.1} parent=1 // pred_check_branch
      %12 = sbr.rel (0) target = $region5
    $region4: #{tpu_custom_call.1} parent=1 // pred_region
      %s14 = ssub.s32 2048, 2048
      %15 = vsyncadd [#allocation3], %s14
      %s17 = sshll.u32 [#allocation2], 4
      %s18 = int_to_ptr.vmem [resolvable:$true] %s17
      %20 = dma.hbm_to_vmem [thread:$0]  %s0, 2048, %s18, [#allocation3]
    $region5: #{tpu_custom_call.1} parent=1 // pred_fallthru
      _
    // Predicated region
    $region6: #{tpu_custom_call.1} parent=1 // pred_check
      _
    $region7: #{tpu_custom_call.1} parent=1 // pred_check_branch
      %22 = sbr.rel (0) target = $region9
    $region8: #{tpu_custom_call.1} parent=1 // pred_region
      %s24 = ssub.s32 131072, 131072
      %25 = vsyncadd [#allocation6], %s24
      %s26 = sshll.u32 [#allocation5], 4
      %s27 = int_to_ptr.vmem [resolvable:$true] %s26
      %32 = dma.hbm_to_vmem [thread:$0]  %s1, 131072, %s27, [#allocation6], 512, 512, 32
    $region9: #{tpu_custom_call.1} parent=1 // pred_fallthru
      _
    // Predicated region
    $region10: #{tpu_custom_call.1} parent=1 // pred_check
      _
    $region11: #{tpu_custom_call.1} parent=1 // pred_check_branch
      %34 = sbr.rel (0) target = $region13
    $region12: #{tpu_custom_call.1} parent=1 // pred_region
      %s36 = ssub.s32 64, 64
      %37 = vsyncadd [#allocation6], %s36
      %s39 = sshll.u32 [#allocation7], 4
      %s40 = int_to_ptr.vmem [resolvable:$true] %s39
      %42 = dma.hbm_to_vmem [thread:$0]  %s2, 64, %s40, [#allocation6]
    $region13: #{tpu_custom_call.1} parent=1 // pred_fallthru
      _
    // Predicated region
    $region14: #{tpu_custom_call.1} parent=1 // pred_check
      _
    $region15: #{tpu_custom_call.1} parent=1 // pred_check_branch
      %44 = sbr.rel (0) target = $region17
    $region16: #{tpu_custom_call.1} parent=1 // pred_region
      %45 = dma.done [#allocation3], 2048
    $region17: #{tpu_custom_call.1} parent=1 // pred_fallthru
      _
    // Predicated region
    $region18: #{tpu_custom_call.1} parent=1 // pred_check
      _
    $region19: #{tpu_custom_call.1} parent=1 // pred_check_branch
      %47 = sbr.rel (0) target = $region21
    $region20: #{tpu_custom_call.1} parent=1 // pred_region
      %48 = dma.done [#allocation6], 131072
    $region21: #{tpu_custom_call.1} parent=1 // pred_fallthru
      _
    // Predicated region
    $region22: #{tpu_custom_call.1} parent=1 // pred_check
      _
    $region23: #{tpu_custom_call.1} parent=1 // pred_check_branch
      %50 = sbr.rel (0) target = $region25
    $region24: #{tpu_custom_call.1} parent=1 // pred_region
      %51 = dma.done [#allocation6], 64
    $region25: #{tpu_custom_call.1} parent=1 // pred_fallthru
      _
    %p52 = scmp.eq.s32.totalorder 0, 0
    // Predicated region
    $region26: #{tpu_custom_call.1} parent=1 // pred_check
      %p53 = pneg %p52
    $region27: #{tpu_custom_call.1} parent=1 // pred_check_branch
      %55 = sbr.rel (%p53) target = $region29
    $region28: #{tpu_custom_call.1} parent=1 // pred_region
      %56 = vst [vmem:[#allocation8] sm:$0xff] 0.0
      %57 = vst [vmem:[#allocation8 + $0x8] sm:$0xff] 0.0
      %58 = vst [vmem:[#allocation8 + $0x10] sm:$0xff] 0.0
      %59 = vst [vmem:[#allocation8 + $0x18] sm:$0xff] 0.0
    $region29: #{tpu_custom_call.1} parent=1 // pred_fallthru
      _
    %v60 = vld [vmem:[#allocation8] sm:$0xff]
    %v61 = vld [vmem:[#allocation8 + $0x8] sm:$0xff]
    %v62 = vld [vmem:[#allocation8 + $0x10] sm:$0xff]
    %v63 = vld [vmem:[#allocation8 + $0x18] sm:$0xff]
    %v64 = vld [vmem:[#allocation2] sm:$0xff]
    %v65 = vld [vmem:[#allocation2 + $0x8] sm:$0xff]
    %v66 = vld [vmem:[#allocation2 + $0x10] sm:$0xff]
    %v67 = vld [vmem:[#allocation2 + $0x18] sm:$0xff]
    %v68 = vld [vmem:[#allocation2 + $0x20] sm:$0xff]
    %v69 = vld [vmem:[#allocation2 + $0x28] sm:$0xff]
    %v70 = vld [vmem:[#allocation2 + $0x30] sm:$0xff]
    %v71 = vld [vmem:[#allocation2 + $0x38] sm:$0xff]
    %v72 = vld [vmem:[#allocation2 + $0x40] sm:$0xff]
    %v73 = vld [vmem:[#allocation2 + $0x48] sm:$0xff]
    %v74 = vld [vmem:[#allocation2 + $0x50] sm:$0xff]
    %v75 = vld [vmem:[#allocation2 + $0x58] sm:$0xff]
    %v76 = vld [vmem:[#allocation2 + $0x60] sm:$0xff]
    %v77 = vld [vmem:[#allocation2 + $0x68] sm:$0xff]
    %v78 = vld [vmem:[#allocation2 + $0x70] sm:$0xff]
    %v79 = vld [vmem:[#allocation2 + $0x78] sm:$0xff]
    %v80 = vld [vmem:[#allocation5] sm:$0xff]
    %v81 = vld [vmem:[#allocation5 + $0x8] sm:$0xff]
    %v82 = vld [vmem:[#allocation5 + $0x10] sm:$0xff]
    %v83 = vld [vmem:[#allocation5 + $0x18] sm:$0xff]
    %v84 = vld [vmem:[#allocation5 + $0x20] sm:$0xff]
    %v85 = vld [vmem:[#allocation5 + $0x28] sm:$0xff]
    %v86 = vld [vmem:[#allocation5 + $0x30] sm:$0xff]
    %v87 = vld [vmem:[#allocation5 + $0x38] sm:$0xff]
    %v88 = vld [vmem:[#allocation5 + $0x40] sm:$0xff]
    %v89 = vld [vmem:[#allocation5 + $0x48] sm:$0xff]
    %v90 = vld [vmem:[#allocation5 + $0x50] sm:$0xff]
    %v91 = vld [vmem:[#allocation5 + $0x58] sm:$0xff]
    %v92 = vld [vmem:[#allocation5 + $0x60] sm:$0xff]
    %v93 = vld [vmem:[#allocation5 + $0x68] sm:$0xff]
    %v94 = vld [vmem:[#allocation5 + $0x70] sm:$0xff]
    %v95 = vld [vmem:[#allocation5 + $0x78] sm:$0xff]
    %v96 = vld [vmem:[#allocation5 + $0x80] sm:$0xff]
    %v97 = vld [vmem:[#allocation5 + $0x88] sm:$0xff]
    %v98 = vld [vmem:[#allocation5 + $0x90] sm:$0xff]
    %v99 = vld [vmem:[#allocation5 + $0x98] sm:$0xff]
    %v100 = vld [vmem:[#allocation5 + $0xa0] sm:$0xff]
    %v101 = vld [vmem:[#allocation5 + $0xa8] sm:$0xff]
    %v102 = vld [vmem:[#allocation5 + $0xb0] sm:$0xff]
    %v103 = vld [vmem:[#allocation5 + $0xb8] sm:$0xff]
    %v104 = vld [vmem:[#allocation5 + $0xc0] sm:$0xff]
    %v105 = vld [vmem:[#allocation5 + $0xc8] sm:$0xff]
    %v106 = vld [vmem:[#allocation5 + $0xd0] sm:$0xff]
    %v107 = vld [vmem:[#allocation5 + $0xd8] sm:$0xff]
    %v108 = vld [vmem:[#allocation5 + $0xe0] sm:$0xff]
    %v109 = vld [vmem:[#allocation5 + $0xe8] sm:$0xff]
    %v110 = vld [vmem:[#allocation5 + $0xf0] sm:$0xff]
    %v111 = vld [vmem:[#allocation5 + $0xf8] sm:$0xff]
    %v112 = vld [vmem:[#allocation5 + $0x100] sm:$0xff]
    %v113 = vld [vmem:[#allocation5 + $0x108] sm:$0xff]
    %v114 = vld [vmem:[#allocation5 + $0x110] sm:$0xff]
    %v115 = vld [vmem:[#allocation5 + $0x118] sm:$0xff]
    %v116 = vld [vmem:[#allocation5 + $0x120] sm:$0xff]
    %v117 = vld [vmem:[#allocation5 + $0x128] sm:$0xff]
    %v118 = vld [vmem:[#allocation5 + $0x130] sm:$0xff]
    %v119 = vld [vmem:[#allocation5 + $0x138] sm:$0xff]
    %v120 = vld [vmem:[#allocation5 + $0x140] sm:$0xff]
    %v121 = vld [vmem:[#allocation5 + $0x148] sm:$0xff]
    %v122 = vld [vmem:[#allocation5 + $0x150] sm:$0xff]
    %v123 = vld [vmem:[#allocation5 + $0x158] sm:$0xff]
    %v124 = vld [vmem:[#allocation5 + $0x160] sm:$0xff]
    %v125 = vld [vmem:[#allocation5 + $0x168] sm:$0xff]
    %v126 = vld [vmem:[#allocation5 + $0x170] sm:$0xff]
    %v127 = vld [vmem:[#allocation5 + $0x178] sm:$0xff]
    %v128 = vld [vmem:[#allocation5 + $0x180] sm:$0xff]
    %v129 = vld [vmem:[#allocation5 + $0x188] sm:$0xff]
    %v130 = vld [vmem:[#allocation5 + $0x190] sm:$0xff]
    %v131 = vld [vmem:[#allocation5 + $0x198] sm:$0xff]
    %v132 = vld [vmem:[#allocation5 + $0x1a0] sm:$0xff]
    %v133 = vld [vmem:[#allocation5 + $0x1a8] sm:$0xff]
    %v134 = vld [vmem:[#allocation5 + $0x1b0] sm:$0xff]
    %v135 = vld [vmem:[#allocation5 + $0x1b8] sm:$0xff]
    %v136 = vld [vmem:[#allocation5 + $0x1c0] sm:$0xff]
    %v137 = vld [vmem:[#allocation5 + $0x1c8] sm:$0xff]
    %v138 = vld [vmem:[#allocation5 + $0x1d0] sm:$0xff]
    %v139 = vld [vmem:[#allocation5 + $0x1d8] sm:$0xff]
    %v140 = vld [vmem:[#allocation5 + $0x1e0] sm:$0xff]
    %v141 = vld [vmem:[#allocation5 + $0x1e8] sm:$0xff]
    %v142 = vld [vmem:[#allocation5 + $0x1f0] sm:$0xff]
    %v143 = vld [vmem:[#allocation5 + $0x1f8] sm:$0xff]
    %v144 = vld [vmem:[#allocation5 + $0x200] sm:$0xff]
    %v145 = vld [vmem:[#allocation5 + $0x208] sm:$0xff]
    %v146 = vld [vmem:[#allocation5 + $0x210] sm:$0xff]
    %v147 = vld [vmem:[#allocation5 + $0x218] sm:$0xff]
    %v148 = vld [vmem:[#allocation5 + $0x220] sm:$0xff]
    %v149 = vld [vmem:[#allocation5 + $0x228] sm:$0xff]
    %v150 = vld [vmem:[#allocation5 + $0x230] sm:$0xff]
    %v151 = vld [vmem:[#allocation5 + $0x238] sm:$0xff]
    %v152 = vld [vmem:[#allocation5 + $0x240] sm:$0xff]
    %v153 = vld [vmem:[#allocation5 + $0x248] sm:$0xff]
    %v154 = vld [vmem:[#allocation5 + $0x250] sm:$0xff]
    %v155 = vld [vmem:[#allocation5 + $0x258] sm:$0xff]
    %v156 = vld [vmem:[#allocation5 + $0x260] sm:$0xff]
    %v157 = vld [vmem:[#allocation5 + $0x268] sm:$0xff]
    %v158 = vld [vmem:[#allocation5 + $0x270] sm:$0xff]
    %v159 = vld [vmem:[#allocation5 + $0x278] sm:$0xff]
    %v160 = vld [vmem:[#allocation5 + $0x280] sm:$0xff]
    %v161 = vld [vmem:[#allocation5 + $0x288] sm:$0xff]
    %v162 = vld [vmem:[#allocation5 + $0x290] sm:$0xff]
    %v163 = vld [vmem:[#allocation5 + $0x298] sm:$0xff]
    %v164 = vld [vmem:[#allocation5 + $0x2a0] sm:$0xff]
    %v165 = vld [vmem:[#allocation5 + $0x2a8] sm:$0xff]
    %v166 = vld [vmem:[#allocation5 + $0x2b0] sm:$0xff]
    %v167 = vld [vmem:[#allocation5 + $0x2b8] sm:$0xff]
    %v168 = vld [vmem:[#allocation5 + $0x2c0] sm:$0xff]
    %v169 = vld [vmem:[#allocation5 + $0x2c8] sm:$0xff]
    %v170 = vld [vmem:[#allocation5 + $0x2d0] sm:$0xff]
    %v171 = vld [vmem:[#allocation5 + $0x2d8] sm:$0xff]
    %v172 = vld [vmem:[#allocation5 + $0x2e0] sm:$0xff]
    %v173 = vld [vmem:[#allocation5 + $0x2e8] sm:$0xff]
    %v174 = vld [vmem:[#allocation5 + $0x2f0] sm:$0xff]
    %v175 = vld [vmem:[#allocation5 + $0x2f8] sm:$0xff]
    %v176 = vld [vmem:[#allocation5 + $0x300] sm:$0xff]
    %v177 = vld [vmem:[#allocation5 + $0x308] sm:$0xff]
    %v178 = vld [vmem:[#allocation5 + $0x310] sm:$0xff]
    %v179 = vld [vmem:[#allocation5 + $0x318] sm:$0xff]
    %v180 = vld [vmem:[#allocation5 + $0x320] sm:$0xff]
    %v181 = vld [vmem:[#allocation5 + $0x328] sm:$0xff]
    %v182 = vld [vmem:[#allocation5 + $0x330] sm:$0xff]
    %v183 = vld [vmem:[#allocation5 + $0x338] sm:$0xff]
    %v184 = vld [vmem:[#allocation5 + $0x340] sm:$0xff]
    %v185 = vld [vmem:[#allocation5 + $0x348] sm:$0xff]
    %v186 = vld [vmem:[#allocation5 + $0x350] sm:$0xff]
    %v187 = vld [vmem:[#allocation5 + $0x358] sm:$0xff]
    %v188 = vld [vmem:[#allocation5 + $0x360] sm:$0xff]
    %v189 = vld [vmem:[#allocation5 + $0x368] sm:$0xff]
    %v190 = vld [vmem:[#allocation5 + $0x370] sm:$0xff]
    %v191 = vld [vmem:[#allocation5 + $0x378] sm:$0xff]
    %v192 = vld [vmem:[#allocation5 + $0x380] sm:$0xff]
    %v193 = vld [vmem:[#allocation5 + $0x388] sm:$0xff]
    %v194 = vld [vmem:[#allocation5 + $0x390] sm:$0xff]
    %v195 = vld [vmem:[#allocation5 + $0x398] sm:$0xff]
    %v196 = vld [vmem:[#allocation5 + $0x3a0] sm:$0xff]
    %v197 = vld [vmem:[#allocation5 + $0x3a8] sm:$0xff]
    %v198 = vld [vmem:[#allocation5 + $0x3b0] sm:$0xff]
    %v199 = vld [vmem:[#allocation5 + $0x3b8] sm:$0xff]
    %v200 = vld [vmem:[#allocation5 + $0x3c0] sm:$0xff]
    %v201 = vld [vmem:[#allocation5 + $0x3c8] sm:$0xff]
    %v202 = vld [vmem:[#allocation5 + $0x3d0] sm:$0xff]
    %v203 = vld [vmem:[#allocation5 + $0x3d8] sm:$0xff]
    %v204 = vld [vmem:[#allocation5 + $0x3e0] sm:$0xff]
    %v205 = vld [vmem:[#allocation5 + $0x3e8] sm:$0xff]
    %v206 = vld [vmem:[#allocation5 + $0x3f0] sm:$0xff]
    %v207 = vld [vmem:[#allocation5 + $0x3f8] sm:$0xff]
    %v208 = vld [vmem:[#allocation5 + $0x400] sm:$0xff]
    %v209 = vld [vmem:[#allocation5 + $0x408] sm:$0xff]
    %v210 = vld [vmem:[#allocation5 + $0x410] sm:$0xff]
    %v211 = vld [vmem:[#allocation5 + $0x418] sm:$0xff]
    %v212 = vld [vmem:[#allocation5 + $0x420] sm:$0xff]
    %v213 = vld [vmem:[#allocation5 + $0x428] sm:$0xff]
    %v214 = vld [vmem:[#allocation5 + $0x430] sm:$0xff]
    %v215 = vld [vmem:[#allocation5 + $0x438] sm:$0xff]
    %v216 = vld [vmem:[#allocation5 + $0x440] sm:$0xff]
    %v217 = vld [vmem:[#allocation5 + $0x448] sm:$0xff]
    %v218 = vld [vmem:[#allocation5 + $0x450] sm:$0xff]
    %v219 = vld [vmem:[#allocation5 + $0x458] sm:$0xff]
    %v220 = vld [vmem:[#allocation5 + $0x460] sm:$0xff]
    %v221 = vld [vmem:[#allocation5 + $0x468] sm:$0xff]
    %v222 = vld [vmem:[#allocation5 + $0x470] sm:$0xff]
    %v223 = vld [vmem:[#allocation5 + $0x478] sm:$0xff]
    %v224 = vld [vmem:[#allocation5 + $0x480] sm:$0xff]
    %v225 = vld [vmem:[#allocation5 + $0x488] sm:$0xff]
    %v226 = vld [vmem:[#allocation5 + $0x490] sm:$0xff]
    %v227 = vld [vmem:[#allocation5 + $0x498] sm:$0xff]
    %v228 = vld [vmem:[#allocation5 + $0x4a0] sm:$0xff]
    %v229 = vld [vmem:[#allocation5 + $0x4a8] sm:$0xff]
    %v230 = vld [vmem:[#allocation5 + $0x4b0] sm:$0xff]
    %v231 = vld [vmem:[#allocation5 + $0x4b8] sm:$0xff]
    %v232 = vld [vmem:[#allocation5 + $0x4c0] sm:$0xff]
    %v233 = vld [vmem:[#allocation5 + $0x4c8] sm:$0xff]
    %v234 = vld [vmem:[#allocation5 + $0x4d0] sm:$0xff]
    %v235 = vld [vmem:[#allocation5 + $0x4d8] sm:$0xff]
    %v236 = vld [vmem:[#allocation5 + $0x4e0] sm:$0xff]
    %v237 = vld [vmem:[#allocation5 + $0x4e8] sm:$0xff]
    %v238 = vld [vmem:[#allocation5 + $0x4f0] sm:$0xff]
    %v239 = vld [vmem:[#allocation5 + $0x4f8] sm:$0xff]
    %v240 = vld [vmem:[#allocation5 + $0x500] sm:$0xff]
    %v241 = vld [vmem:[#allocation5 + $0x508] sm:$0xff]
    %v242 = vld [vmem:[#allocation5 + $0x510] sm:$0xff]
    %v243 = vld [vmem:[#allocation5 + $0x518] sm:$0xff]
    %v244 = vld [vmem:[#allocation5 + $0x520] sm:$0xff]
    %v245 = vld [vmem:[#allocation5 + $0x528] sm:$0xff]
    %v246 = vld [vmem:[#allocation5 + $0x530] sm:$0xff]
    %v247 = vld [vmem:[#allocation5 + $0x538] sm:$0xff]
    %v248 = vld [vmem:[#allocation5 + $0x540] sm:$0xff]
    %v249 = vld [vmem:[#allocation5 + $0x548] sm:$0xff]
    %v250 = vld [vmem:[#allocation5 + $0x550] sm:$0xff]
    %v251 = vld [vmem:[#allocation5 + $0x558] sm:$0xff]
    %v252 = vld [vmem:[#allocation5 + $0x560] sm:$0xff]
    %v253 = vld [vmem:[#allocation5 + $0x568] sm:$0xff]
    %v254 = vld [vmem:[#allocation5 + $0x570] sm:$0xff]
    %v255 = vld [vmem:[#allocation5 + $0x578] sm:$0xff]
    %v256 = vld [vmem:[#allocation5 + $0x580] sm:$0xff]
    %v257 = vld [vmem:[#allocation5 + $0x588] sm:$0xff]
    %v258 = vld [vmem:[#allocation5 + $0x590] sm:$0xff]
    %v259 = vld [vmem:[#allocation5 + $0x598] sm:$0xff]
    %v260 = vld [vmem:[#allocation5 + $0x5a0] sm:$0xff]
    %v261 = vld [vmem:[#allocation5 + $0x5a8] sm:$0xff]
    %v262 = vld [vmem:[#allocation5 + $0x5b0] sm:$0xff]
    %v263 = vld [vmem:[#allocation5 + $0x5b8] sm:$0xff]
    %v264 = vld [vmem:[#allocation5 + $0x5c0] sm:$0xff]
    %v265 = vld [vmem:[#allocation5 + $0x5c8] sm:$0xff]
    %v266 = vld [vmem:[#allocation5 + $0x5d0] sm:$0xff]
    %v267 = vld [vmem:[#allocation5 + $0x5d8] sm:$0xff]
    %v268 = vld [vmem:[#allocation5 + $0x5e0] sm:$0xff]
    %v269 = vld [vmem:[#allocation5 + $0x5e8] sm:$0xff]
    %v270 = vld [vmem:[#allocation5 + $0x5f0] sm:$0xff]
    %v271 = vld [vmem:[#allocation5 + $0x5f8] sm:$0xff]
    %v272 = vld [vmem:[#allocation5 + $0x600] sm:$0xff]
    %v273 = vld [vmem:[#allocation5 + $0x608] sm:$0xff]
    %v274 = vld [vmem:[#allocation5 + $0x610] sm:$0xff]
    %v275 = vld [vmem:[#allocation5 + $0x618] sm:$0xff]
    %v276 = vld [vmem:[#allocation5 + $0x620] sm:$0xff]
    %v277 = vld [vmem:[#allocation5 + $0x628] sm:$0xff]
    %v278 = vld [vmem:[#allocation5 + $0x630] sm:$0xff]
    %v279 = vld [vmem:[#allocation5 + $0x638] sm:$0xff]
    %v280 = vld [vmem:[#allocation5 + $0x640] sm:$0xff]
    %v281 = vld [vmem:[#allocation5 + $0x648] sm:$0xff]
    %v282 = vld [vmem:[#allocation5 + $0x650] sm:$0xff]
    %v283 = vld [vmem:[#allocation5 + $0x658] sm:$0xff]
    %v284 = vld [vmem:[#allocation5 + $0x660] sm:$0xff]
    %v285 = vld [vmem:[#allocation5 + $0x668] sm:$0xff]
    %v286 = vld [vmem:[#allocation5 + $0x670] sm:$0xff]
    %v287 = vld [vmem:[#allocation5 + $0x678] sm:$0xff]
    %v288 = vld [vmem:[#allocation5 + $0x680] sm:$0xff]
    %v289 = vld [vmem:[#allocation5 + $0x688] sm:$0xff]
    %v290 = vld [vmem:[#allocation5 + $0x690] sm:$0xff]
    %v291 = vld [vmem:[#allocation5 + $0x698] sm:$0xff]
    %v292 = vld [vmem:[#allocation5 + $0x6a0] sm:$0xff]
    %v293 = vld [vmem:[#allocation5 + $0x6a8] sm:$0xff]
    %v294 = vld [vmem:[#allocation5 + $0x6b0] sm:$0xff]
    %v295 = vld [vmem:[#allocation5 + $0x6b8] sm:$0xff]
    %v296 = vld [vmem:[#allocation5 + $0x6c0] sm:$0xff]
    %v297 = vld [vmem:[#allocation5 + $0x6c8] sm:$0xff]
    %v298 = vld [vmem:[#allocation5 + $0x6d0] sm:$0xff]
    %v299 = vld [vmem:[#allocation5 + $0x6d8] sm:$0xff]
    %v300 = vld [vmem:[#allocation5 + $0x6e0] sm:$0xff]
    %v301 = vld [vmem:[#allocation5 + $0x6e8] sm:$0xff]
    %v302 = vld [vmem:[#allocation5 + $0x6f0] sm:$0xff]
    %v303 = vld [vmem:[#allocation5 + $0x6f8] sm:$0xff]
    %v304 = vld [vmem:[#allocation5 + $0x700] sm:$0xff]
    %v305 = vld [vmem:[#allocation5 + $0x708] sm:$0xff]
    %v306 = vld [vmem:[#allocation5 + $0x710] sm:$0xff]
    %v307 = vld [vmem:[#allocation5 + $0x718] sm:$0xff]
    %v308 = vld [vmem:[#allocation5 + $0x720] sm:$0xff]
    %v309 = vld [vmem:[#allocation5 + $0x728] sm:$0xff]
    %v310 = vld [vmem:[#allocation5 + $0x730] sm:$0xff]
    %v311 = vld [vmem:[#allocation5 + $0x738] sm:$0xff]
    %v312 = vld [vmem:[#allocation5 + $0x740] sm:$0xff]
    %v313 = vld [vmem:[#allocation5 + $0x748] sm:$0xff]
    %v314 = vld [vmem:[#allocation5 + $0x750] sm:$0xff]
    %v315 = vld [vmem:[#allocation5 + $0x758] sm:$0xff]
    %v316 = vld [vmem:[#allocation5 + $0x760] sm:$0xff]
    %v317 = vld [vmem:[#allocation5 + $0x768] sm:$0xff]
    %v318 = vld [vmem:[#allocation5 + $0x770] sm:$0xff]
    %v319 = vld [vmem:[#allocation5 + $0x778] sm:$0xff]
    %v320 = vld [vmem:[#allocation5 + $0x780] sm:$0xff]
    %v321 = vld [vmem:[#allocation5 + $0x788] sm:$0xff]
    %v322 = vld [vmem:[#allocation5 + $0x790] sm:$0xff]
    %v323 = vld [vmem:[#allocation5 + $0x798] sm:$0xff]
    %v324 = vld [vmem:[#allocation5 + $0x7a0] sm:$0xff]
    %v325 = vld [vmem:[#allocation5 + $0x7a8] sm:$0xff]
    %v326 = vld [vmem:[#allocation5 + $0x7b0] sm:$0xff]
    %v327 = vld [vmem:[#allocation5 + $0x7b8] sm:$0xff]
    %v328 = vld [vmem:[#allocation5 + $0x7c0] sm:$0xff]
    %v329 = vld [vmem:[#allocation5 + $0x7c8] sm:$0xff]
    %v330 = vld [vmem:[#allocation5 + $0x7d0] sm:$0xff]
    %v331 = vld [vmem:[#allocation5 + $0x7d8] sm:$0xff]
    %v332 = vld [vmem:[#allocation5 + $0x7e0] sm:$0xff]
    %v333 = vld [vmem:[#allocation5 + $0x7e8] sm:$0xff]
    %v334 = vld [vmem:[#allocation5 + $0x7f0] sm:$0xff]
    %v335 = vld [vmem:[#allocation5 + $0x7f8] sm:$0xff]
    %v336 = vld [vmem:[#allocation5 + $0x800] sm:$0xff]
    %v337 = vld [vmem:[#allocation5 + $0x808] sm:$0xff]
    %v338 = vld [vmem:[#allocation5 + $0x810] sm:$0xff]
    %v339 = vld [vmem:[#allocation5 + $0x818] sm:$0xff]
    %v340 = vld [vmem:[#allocation5 + $0x820] sm:$0xff]
    %v341 = vld [vmem:[#allocation5 + $0x828] sm:$0xff]
    %v342 = vld [vmem:[#allocation5 + $0x830] sm:$0xff]
    %v343 = vld [vmem:[#allocation5 + $0x838] sm:$0xff]
    %v344 = vld [vmem:[#allocation5 + $0x840] sm:$0xff]
    %v345 = vld [vmem:[#allocation5 + $0x848] sm:$0xff]
    %v346 = vld [vmem:[#allocation5 + $0x850] sm:$0xff]
    %v347 = vld [vmem:[#allocation5 + $0x858] sm:$0xff]
    %v348 = vld [vmem:[#allocation5 + $0x860] sm:$0xff]
    %v349 = vld [vmem:[#allocation5 + $0x868] sm:$0xff]
    %v350 = vld [vmem:[#allocation5 + $0x870] sm:$0xff]
    %v351 = vld [vmem:[#allocation5 + $0x878] sm:$0xff]
    %v352 = vld [vmem:[#allocation5 + $0x880] sm:$0xff]
    %v353 = vld [vmem:[#allocation5 + $0x888] sm:$0xff]
    %v354 = vld [vmem:[#allocation5 + $0x890] sm:$0xff]
    %v355 = vld [vmem:[#allocation5 + $0x898] sm:$0xff]
    %v356 = vld [vmem:[#allocation5 + $0x8a0] sm:$0xff]
    %v357 = vld [vmem:[#allocation5 + $0x8a8] sm:$0xff]
    %v358 = vld [vmem:[#allocation5 + $0x8b0] sm:$0xff]
    %v359 = vld [vmem:[#allocation5 + $0x8b8] sm:$0xff]
    %v360 = vld [vmem:[#allocation5 + $0x8c0] sm:$0xff]
    %v361 = vld [vmem:[#allocation5 + $0x8c8] sm:$0xff]
    %v362 = vld [vmem:[#allocation5 + $0x8d0] sm:$0xff]
    %v363 = vld [vmem:[#allocation5 + $0x8d8] sm:$0xff]
    %v364 = vld [vmem:[#allocation5 + $0x8e0] sm:$0xff]
    %v365 = vld [vmem:[#allocation5 + $0x8e8] sm:$0xff]
    %v366 = vld [vmem:[#allocation5 + $0x8f0] sm:$0xff]
    %v367 = vld [vmem:[#allocation5 + $0x8f8] sm:$0xff]
    %v368 = vld [vmem:[#allocation5 + $0x900] sm:$0xff]
    %v369 = vld [vmem:[#allocation5 + $0x908] sm:$0xff]
    %v370 = vld [vmem:[#allocation5 + $0x910] sm:$0xff]
    %v371 = vld [vmem:[#allocation5 + $0x918] sm:$0xff]
    %v372 = vld [vmem:[#allocation5 + $0x920] sm:$0xff]
    %v373 = vld [vmem:[#allocation5 + $0x928] sm:$0xff]
    %v374 = vld [vmem:[#allocation5 + $0x930] sm:$0xff]
    %v375 = vld [vmem:[#allocation5 + $0x938] sm:$0xff]
    %v376 = vld [vmem:[#allocation5 + $0x940] sm:$0xff]
    %v377 = vld [vmem:[#allocation5 + $0x948] sm:$0xff]
    %v378 = vld [vmem:[#allocation5 + $0x950] sm:$0xff]
    %v379 = vld [vmem:[#allocation5 + $0x958] sm:$0xff]
    %v380 = vld [vmem:[#allocation5 + $0x960] sm:$0xff]
    %v381 = vld [vmem:[#allocation5 + $0x968] sm:$0xff]
    %v382 = vld [vmem:[#allocation5 + $0x970] sm:$0xff]
    %v383 = vld [vmem:[#allocation5 + $0x978] sm:$0xff]
    %v384 = vld [vmem:[#allocation5 + $0x980] sm:$0xff]
    %v385 = vld [vmem:[#allocation5 + $0x988] sm:$0xff]
    %v386 = vld [vmem:[#allocation5 + $0x990] sm:$0xff]
    %v387 = vld [vmem:[#allocation5 + $0x998] sm:$0xff]
    %v388 = vld [vmem:[#allocation5 + $0x9a0] sm:$0xff]
    %v389 = vld [vmem:[#allocation5 + $0x9a8] sm:$0xff]
    %v390 = vld [vmem:[#allocation5 + $0x9b0] sm:$0xff]
    %v391 = vld [vmem:[#allocation5 + $0x9b8] sm:$0xff]
    %v392 = vld [vmem:[#allocation5 + $0x9c0] sm:$0xff]
    %v393 = vld [vmem:[#allocation5 + $0x9c8] sm:$0xff]
    %v394 = vld [vmem:[#allocation5 + $0x9d0] sm:$0xff]
    %v395 = vld [vmem:[#allocation5 + $0x9d8] sm:$0xff]
    %v396 = vld [vmem:[#allocation5 + $0x9e0] sm:$0xff]
    %v397 = vld [vmem:[#allocation5 + $0x9e8] sm:$0xff]
    %v398 = vld [vmem:[#allocation5 + $0x9f0] sm:$0xff]
    %v399 = vld [vmem:[#allocation5 + $0x9f8] sm:$0xff]
    %v400 = vld [vmem:[#allocation5 + $0xa00] sm:$0xff]
    %v401 = vld [vmem:[#allocation5 + $0xa08] sm:$0xff]
    %v402 = vld [vmem:[#allocation5 + $0xa10] sm:$0xff]
    %v403 = vld [vmem:[#allocation5 + $0xa18] sm:$0xff]
    %v404 = vld [vmem:[#allocation5 + $0xa20] sm:$0xff]
    %v405 = vld [vmem:[#allocation5 + $0xa28] sm:$0xff]
    %v406 = vld [vmem:[#allocation5 + $0xa30] sm:$0xff]
    %v407 = vld [vmem:[#allocation5 + $0xa38] sm:$0xff]
    %v408 = vld [vmem:[#allocation5 + $0xa40] sm:$0xff]
    %v409 = vld [vmem:[#allocation5 + $0xa48] sm:$0xff]
    %v410 = vld [vmem:[#allocation5 + $0xa50] sm:$0xff]
    %v411 = vld [vmem:[#allocation5 + $0xa58] sm:$0xff]
    %v412 = vld [vmem:[#allocation5 + $0xa60] sm:$0xff]
    %v413 = vld [vmem:[#allocation5 + $0xa68] sm:$0xff]
    %v414 = vld [vmem:[#allocation5 + $0xa70] sm:$0xff]
    %v415 = vld [vmem:[#allocation5 + $0xa78] sm:$0xff]
    %v416 = vld [vmem:[#allocation5 + $0xa80] sm:$0xff]
    %v417 = vld [vmem:[#allocation5 + $0xa88] sm:$0xff]
    %v418 = vld [vmem:[#allocation5 + $0xa90] sm:$0xff]
    %v419 = vld [vmem:[#allocation5 + $0xa98] sm:$0xff]
    %v420 = vld [vmem:[#allocation5 + $0xaa0] sm:$0xff]
    %v421 = vld [vmem:[#allocation5 + $0xaa8] sm:$0xff]
    %v422 = vld [vmem:[#allocation5 + $0xab0] sm:$0xff]
    %v423 = vld [vmem:[#allocation5 + $0xab8] sm:$0xff]
    %v424 = vld [vmem:[#allocation5 + $0xac0] sm:$0xff]
    %v425 = vld [vmem:[#allocation5 + $0xac8] sm:$0xff]
    %v426 = vld [vmem:[#allocation5 + $0xad0] sm:$0xff]
    %v427 = vld [vmem:[#allocation5 + $0xad8] sm:$0xff]
    %v428 = vld [vmem:[#allocation5 + $0xae0] sm:$0xff]
    %v429 = vld [vmem:[#allocation5 + $0xae8] sm:$0xff]
    %v430 = vld [vmem:[#allocation5 + $0xaf0] sm:$0xff]
    %v431 = vld [vmem:[#allocation5 + $0xaf8] sm:$0xff]
    %v432 = vld [vmem:[#allocation5 + $0xb00] sm:$0xff]
    %v433 = vld [vmem:[#allocation5 + $0xb08] sm:$0xff]
    %v434 = vld [vmem:[#allocation5 + $0xb10] sm:$0xff]
    %v435 = vld [vmem:[#allocation5 + $0xb18] sm:$0xff]
    %v436 = vld [vmem:[#allocation5 + $0xb20] sm:$0xff]
    %v437 = vld [vmem:[#allocation5 + $0xb28] sm:$0xff]
    %v438 = vld [vmem:[#allocation5 + $0xb30] sm:$0xff]
    %v439 = vld [vmem:[#allocation5 + $0xb38] sm:$0xff]
    %v440 = vld [vmem:[#allocation5 + $0xb40] sm:$0xff]
    %v441 = vld [vmem:[#allocation5 + $0xb48] sm:$0xff]
    %v442 = vld [vmem:[#allocation5 + $0xb50] sm:$0xff]
    %v443 = vld [vmem:[#allocation5 + $0xb58] sm:$0xff]
    %v444 = vld [vmem:[#allocation5 + $0xb60] sm:$0xff]
    %v445 = vld [vmem:[#allocation5 + $0xb68] sm:$0xff]
    %v446 = vld [vmem:[#allocation5 + $0xb70] sm:$0xff]
    %v447 = vld [vmem:[#allocation5 + $0xb78] sm:$0xff]
    %v448 = vld [vmem:[#allocation5 + $0xb80] sm:$0xff]
    %v449 = vld [vmem:[#allocation5 + $0xb88] sm:$0xff]
    %v450 = vld [vmem:[#allocation5 + $0xb90] sm:$0xff]
    %v451 = vld [vmem:[#allocation5 + $0xb98] sm:$0xff]
    %v452 = vld [vmem:[#allocation5 + $0xba0] sm:$0xff]
    %v453 = vld [vmem:[#allocation5 + $0xba8] sm:$0xff]
    %v454 = vld [vmem:[#allocation5 + $0xbb0] sm:$0xff]
    %v455 = vld [vmem:[#allocation5 + $0xbb8] sm:$0xff]
    %v456 = vld [vmem:[#allocation5 + $0xbc0] sm:$0xff]
    %v457 = vld [vmem:[#allocation5 + $0xbc8] sm:$0xff]
    %v458 = vld [vmem:[#allocation5 + $0xbd0] sm:$0xff]
    %v459 = vld [vmem:[#allocation5 + $0xbd8] sm:$0xff]
    %v460 = vld [vmem:[#allocation5 + $0xbe0] sm:$0xff]
    %v461 = vld [vmem:[#allocation5 + $0xbe8] sm:$0xff]
    %v462 = vld [vmem:[#allocation5 + $0xbf0] sm:$0xff]
    %v463 = vld [vmem:[#allocation5 + $0xbf8] sm:$0xff]
    %v464 = vld [vmem:[#allocation5 + $0xc00] sm:$0xff]
    %v465 = vld [vmem:[#allocation5 + $0xc08] sm:$0xff]
    %v466 = vld [vmem:[#allocation5 + $0xc10] sm:$0xff]
    %v467 = vld [vmem:[#allocation5 + $0xc18] sm:$0xff]
    %v468 = vld [vmem:[#allocation5 + $0xc20] sm:$0xff]
    %v469 = vld [vmem:[#allocation5 + $0xc28] sm:$0xff]
    %v470 = vld [vmem:[#allocation5 + $0xc30] sm:$0xff]
    %v471 = vld [vmem:[#allocation5 + $0xc38] sm:$0xff]
    %v472 = vld [vmem:[#allocation5 + $0xc40] sm:$0xff]
    %v473 = vld [vmem:[#allocation5 + $0xc48] sm:$0xff]
    %v474 = vld [vmem:[#allocation5 + $0xc50] sm:$0xff]
    %v475 = vld [vmem:[#allocation5 + $0xc58] sm:$0xff]
    %v476 = vld [vmem:[#allocation5 + $0xc60] sm:$0xff]
    %v477 = vld [vmem:[#allocation5 + $0xc68] sm:$0xff]
    %v478 = vld [vmem:[#allocation5 + $0xc70] sm:$0xff]
    %v479 = vld [vmem:[#allocation5 + $0xc78] sm:$0xff]
    %v480 = vld [vmem:[#allocation5 + $0xc80] sm:$0xff]
    %v481 = vld [vmem:[#allocation5 + $0xc88] sm:$0xff]
    %v482 = vld [vmem:[#allocation5 + $0xc90] sm:$0xff]
    %v483 = vld [vmem:[#allocation5 + $0xc98] sm:$0xff]
    %v484 = vld [vmem:[#allocation5 + $0xca0] sm:$0xff]
    %v485 = vld [vmem:[#allocation5 + $0xca8] sm:$0xff]
    %v486 = vld [vmem:[#allocation5 + $0xcb0] sm:$0xff]
    %v487 = vld [vmem:[#allocation5 + $0xcb8] sm:$0xff]
    %v488 = vld [vmem:[#allocation5 + $0xcc0] sm:$0xff]
    %v489 = vld [vmem:[#allocation5 + $0xcc8] sm:$0xff]
    %v490 = vld [vmem:[#allocation5 + $0xcd0] sm:$0xff]
    %v491 = vld [vmem:[#allocation5 + $0xcd8] sm:$0xff]
    %v492 = vld [vmem:[#allocation5 + $0xce0] sm:$0xff]
    %v493 = vld [vmem:[#allocation5 + $0xce8] sm:$0xff]
    %v494 = vld [vmem:[#allocation5 + $0xcf0] sm:$0xff]
    %v495 = vld [vmem:[#allocation5 + $0xcf8] sm:$0xff]
    %v496 = vld [vmem:[#allocation5 + $0xd00] sm:$0xff]
    %v497 = vld [vmem:[#allocation5 + $0xd08] sm:$0xff]
    %v498 = vld [vmem:[#allocation5 + $0xd10] sm:$0xff]
    %v499 = vld [vmem:[#allocation5 + $0xd18] sm:$0xff]
    %v500 = vld [vmem:[#allocation5 + $0xd20] sm:$0xff]
    %v501 = vld [vmem:[#allocation5 + $0xd28] sm:$0xff]
    %v502 = vld [vmem:[#allocation5 + $0xd30] sm:$0xff]
    %v503 = vld [vmem:[#allocation5 + $0xd38] sm:$0xff]
    %v504 = vld [vmem:[#allocation5 + $0xd40] sm:$0xff]
    %v505 = vld [vmem:[#allocation5 + $0xd48] sm:$0xff]
    %v506 = vld [vmem:[#allocation5 + $0xd50] sm:$0xff]
    %v507 = vld [vmem:[#allocation5 + $0xd58] sm:$0xff]
    %v508 = vld [vmem:[#allocation5 + $0xd60] sm:$0xff]
    %v509 = vld [vmem:[#allocation5 + $0xd68] sm:$0xff]
    %v510 = vld [vmem:[#allocation5 + $0xd70] sm:$0xff]
    %v511 = vld [vmem:[#allocation5 + $0xd78] sm:$0xff]
    %v512 = vld [vmem:[#allocation5 + $0xd80] sm:$0xff]
    %v513 = vld [vmem:[#allocation5 + $0xd88] sm:$0xff]
    %v514 = vld [vmem:[#allocation5 + $0xd90] sm:$0xff]
    %v515 = vld [vmem:[#allocation5 + $0xd98] sm:$0xff]
    %v516 = vld [vmem:[#allocation5 + $0xda0] sm:$0xff]
    %v517 = vld [vmem:[#allocation5 + $0xda8] sm:$0xff]
    %v518 = vld [vmem:[#allocation5 + $0xdb0] sm:$0xff]
    %v519 = vld [vmem:[#allocation5 + $0xdb8] sm:$0xff]
    %v520 = vld [vmem:[#allocation5 + $0xdc0] sm:$0xff]
    %v521 = vld [vmem:[#allocation5 + $0xdc8] sm:$0xff]
    %v522 = vld [vmem:[#allocation5 + $0xdd0] sm:$0xff]
    %v523 = vld [vmem:[#allocation5 + $0xdd8] sm:$0xff]
    %v524 = vld [vmem:[#allocation5 + $0xde0] sm:$0xff]
    %v525 = vld [vmem:[#allocation5 + $0xde8] sm:$0xff]
    %v526 = vld [vmem:[#allocation5 + $0xdf0] sm:$0xff]
    %v527 = vld [vmem:[#allocation5 + $0xdf8] sm:$0xff]
    %v528 = vld [vmem:[#allocation5 + $0xe00] sm:$0xff]
    %v529 = vld [vmem:[#allocation5 + $0xe08] sm:$0xff]
    %v530 = vld [vmem:[#allocation5 + $0xe10] sm:$0xff]
    %v531 = vld [vmem:[#allocation5 + $0xe18] sm:$0xff]
    %v532 = vld [vmem:[#allocation5 + $0xe20] sm:$0xff]
    %v533 = vld [vmem:[#allocation5 + $0xe28] sm:$0xff]
    %v534 = vld [vmem:[#allocation5 + $0xe30] sm:$0xff]
    %v535 = vld [vmem:[#allocation5 + $0xe38] sm:$0xff]
    %v536 = vld [vmem:[#allocation5 + $0xe40] sm:$0xff]
    %v537 = vld [vmem:[#allocation5 + $0xe48] sm:$0xff]
    %v538 = vld [vmem:[#allocation5 + $0xe50] sm:$0xff]
    %v539 = vld [vmem:[#allocation5 + $0xe58] sm:$0xff]
    %v540 = vld [vmem:[#allocation5 + $0xe60] sm:$0xff]
    %v541 = vld [vmem:[#allocation5 + $0xe68] sm:$0xff]
    %v542 = vld [vmem:[#allocation5 + $0xe70] sm:$0xff]
    %v543 = vld [vmem:[#allocation5 + $0xe78] sm:$0xff]
    %v544 = vld [vmem:[#allocation5 + $0xe80] sm:$0xff]
    %v545 = vld [vmem:[#allocation5 + $0xe88] sm:$0xff]
    %v546 = vld [vmem:[#allocation5 + $0xe90] sm:$0xff]
    %v547 = vld [vmem:[#allocation5 + $0xe98] sm:$0xff]
    %v548 = vld [vmem:[#allocation5 + $0xea0] sm:$0xff]
    %v549 = vld [vmem:[#allocation5 + $0xea8] sm:$0xff]
    %v550 = vld [vmem:[#allocation5 + $0xeb0] sm:$0xff]
    %v551 = vld [vmem:[#allocation5 + $0xeb8] sm:$0xff]
    %v552 = vld [vmem:[#allocation5 + $0xec0] sm:$0xff]
    %v553 = vld [vmem:[#allocation5 + $0xec8] sm:$0xff]
    %v554 = vld [vmem:[#allocation5 + $0xed0] sm:$0xff]
    %v555 = vld [vmem:[#allocation5 + $0xed8] sm:$0xff]
    %v556 = vld [vmem:[#allocation5 + $0xee0] sm:$0xff]
    %v557 = vld [vmem:[#allocation5 + $0xee8] sm:$0xff]
    %v558 = vld [vmem:[#allocation5 + $0xef0] sm:$0xff]
    %v559 = vld [vmem:[#allocation5 + $0xef8] sm:$0xff]
    %v560 = vld [vmem:[#allocation5 + $0xf00] sm:$0xff]
    %v561 = vld [vmem:[#allocation5 + $0xf08] sm:$0xff]
    %v562 = vld [vmem:[#allocation5 + $0xf10] sm:$0xff]
    %v563 = vld [vmem:[#allocation5 + $0xf18] sm:$0xff]
    %v564 = vld [vmem:[#allocation5 + $0xf20] sm:$0xff]
    %v565 = vld [vmem:[#allocation5 + $0xf28] sm:$0xff]
    %v566 = vld [vmem:[#allocation5 + $0xf30] sm:$0xff]
    %v567 = vld [vmem:[#allocation5 + $0xf38] sm:$0xff]
    %v568 = vld [vmem:[#allocation5 + $0xf40] sm:$0xff]
    %v569 = vld [vmem:[#allocation5 + $0xf48] sm:$0xff]
    %v570 = vld [vmem:[#allocation5 + $0xf50] sm:$0xff]
    %v571 = vld [vmem:[#allocation5 + $0xf58] sm:$0xff]
    %v572 = vld [vmem:[#allocation5 + $0xf60] sm:$0xff]
    %v573 = vld [vmem:[#allocation5 + $0xf68] sm:$0xff]
    %v574 = vld [vmem:[#allocation5 + $0xf70] sm:$0xff]
    %v575 = vld [vmem:[#allocation5 + $0xf78] sm:$0xff]
    %v576 = vld [vmem:[#allocation5 + $0xf80] sm:$0xff]
    %v577 = vld [vmem:[#allocation5 + $0xf88] sm:$0xff]
    %v578 = vld [vmem:[#allocation5 + $0xf90] sm:$0xff]
    %v579 = vld [vmem:[#allocation5 + $0xf98] sm:$0xff]
    %v580 = vld [vmem:[#allocation5 + $0xfa0] sm:$0xff]
    %v581 = vld [vmem:[#allocation5 + $0xfa8] sm:$0xff]
    %v582 = vld [vmem:[#allocation5 + $0xfb0] sm:$0xff]
    %v583 = vld [vmem:[#allocation5 + $0xfb8] sm:$0xff]
    %v584 = vld [vmem:[#allocation5 + $0xfc0] sm:$0xff]
    %v585 = vld [vmem:[#allocation5 + $0xfc8] sm:$0xff]
    %v586 = vld [vmem:[#allocation5 + $0xfd0] sm:$0xff]
    %v587 = vld [vmem:[#allocation5 + $0xfd8] sm:$0xff]
    %v588 = vld [vmem:[#allocation5 + $0xfe0] sm:$0xff]
    %v589 = vld [vmem:[#allocation5 + $0xfe8] sm:$0xff]
    %v590 = vld [vmem:[#allocation5 + $0xff0] sm:$0xff]
    %v591 = vld [vmem:[#allocation5 + $0xff8] sm:$0xff]
    %v592 = vld [vmem:[#allocation5 + $0x1000] sm:$0xff]
    %v593 = vld [vmem:[#allocation5 + $0x1008] sm:$0xff]
    %v594 = vld [vmem:[#allocation5 + $0x1010] sm:$0xff]
    %v595 = vld [vmem:[#allocation5 + $0x1018] sm:$0xff]
    %v596 = vld [vmem:[#allocation5 + $0x1020] sm:$0xff]
    %v597 = vld [vmem:[#allocation5 + $0x1028] sm:$0xff]
    %v598 = vld [vmem:[#allocation5 + $0x1030] sm:$0xff]
    %v599 = vld [vmem:[#allocation5 + $0x1038] sm:$0xff]
    %v600 = vld [vmem:[#allocation5 + $0x1040] sm:$0xff]
    %v601 = vld [vmem:[#allocation5 + $0x1048] sm:$0xff]
    %v602 = vld [vmem:[#allocation5 + $0x1050] sm:$0xff]
    %v603 = vld [vmem:[#allocation5 + $0x1058] sm:$0xff]
    %v604 = vld [vmem:[#allocation5 + $0x1060] sm:$0xff]
    %v605 = vld [vmem:[#allocation5 + $0x1068] sm:$0xff]
    %v606 = vld [vmem:[#allocation5 + $0x1070] sm:$0xff]
    %v607 = vld [vmem:[#allocation5 + $0x1078] sm:$0xff]
    %v608 = vld [vmem:[#allocation5 + $0x1080] sm:$0xff]
    %v609 = vld [vmem:[#allocation5 + $0x1088] sm:$0xff]
    %v610 = vld [vmem:[#allocation5 + $0x1090] sm:$0xff]
    %v611 = vld [vmem:[#allocation5 + $0x1098] sm:$0xff]
    %v612 = vld [vmem:[#allocation5 + $0x10a0] sm:$0xff]
    %v613 = vld [vmem:[#allocation5 + $0x10a8] sm:$0xff]
    %v614 = vld [vmem:[#allocation5 + $0x10b0] sm:$0xff]
    %v615 = vld [vmem:[#allocation5 + $0x10b8] sm:$0xff]
    %v616 = vld [vmem:[#allocation5 + $0x10c0] sm:$0xff]
    %v617 = vld [vmem:[#allocation5 + $0x10c8] sm:$0xff]
    %v618 = vld [vmem:[#allocation5 + $0x10d0] sm:$0xff]
    %v619 = vld [vmem:[#allocation5 + $0x10d8] sm:$0xff]
    %v620 = vld [vmem:[#allocation5 + $0x10e0] sm:$0xff]
    %v621 = vld [vmem:[#allocation5 + $0x10e8] sm:$0xff]
    %v622 = vld [vmem:[#allocation5 + $0x10f0] sm:$0xff]
    %v623 = vld [vmem:[#allocation5 + $0x10f8] sm:$0xff]
    %v624 = vld [vmem:[#allocation5 + $0x1100] sm:$0xff]
    %v625 = vld [vmem:[#allocation5 + $0x1108] sm:$0xff]
    %v626 = vld [vmem:[#allocation5 + $0x1110] sm:$0xff]
    %v627 = vld [vmem:[#allocation5 + $0x1118] sm:$0xff]
    %v628 = vld [vmem:[#allocation5 + $0x1120] sm:$0xff]
    %v629 = vld [vmem:[#allocation5 + $0x1128] sm:$0xff]
    %v630 = vld [vmem:[#allocation5 + $0x1130] sm:$0xff]
    %v631 = vld [vmem:[#allocation5 + $0x1138] sm:$0xff]
    %v632 = vld [vmem:[#allocation5 + $0x1140] sm:$0xff]
    %v633 = vld [vmem:[#allocation5 + $0x1148] sm:$0xff]
    %v634 = vld [vmem:[#allocation5 + $0x1150] sm:$0xff]
    %v635 = vld [vmem:[#allocation5 + $0x1158] sm:$0xff]
    %v636 = vld [vmem:[#allocation5 + $0x1160] sm:$0xff]
    %v637 = vld [vmem:[#allocation5 + $0x1168] sm:$0xff]
    %v638 = vld [vmem:[#allocation5 + $0x1170] sm:$0xff]
    %v639 = vld [vmem:[#allocation5 + $0x1178] sm:$0xff]
    %v640 = vld [vmem:[#allocation5 + $0x1180] sm:$0xff]
    %v641 = vld [vmem:[#allocation5 + $0x1188] sm:$0xff]
    %v642 = vld [vmem:[#allocation5 + $0x1190] sm:$0xff]
    %v643 = vld [vmem:[#allocation5 + $0x1198] sm:$0xff]
    %v644 = vld [vmem:[#allocation5 + $0x11a0] sm:$0xff]
    %v645 = vld [vmem:[#allocation5 + $0x11a8] sm:$0xff]
    %v646 = vld [vmem:[#allocation5 + $0x11b0] sm:$0xff]
    %v647 = vld [vmem:[#allocation5 + $0x11b8] sm:$0xff]
    %v648 = vld [vmem:[#allocation5 + $0x11c0] sm:$0xff]
    %v649 = vld [vmem:[#allocation5 + $0x11c8] sm:$0xff]
    %v650 = vld [vmem:[#allocation5 + $0x11d0] sm:$0xff]
    %v651 = vld [vmem:[#allocation5 + $0x11d8] sm:$0xff]
    %v652 = vld [vmem:[#allocation5 + $0x11e0] sm:$0xff]
    %v653 = vld [vmem:[#allocation5 + $0x11e8] sm:$0xff]
    %v654 = vld [vmem:[#allocation5 + $0x11f0] sm:$0xff]
    %v655 = vld [vmem:[#allocation5 + $0x11f8] sm:$0xff]
    %v656 = vld [vmem:[#allocation5 + $0x1200] sm:$0xff]
    %v657 = vld [vmem:[#allocation5 + $0x1208] sm:$0xff]
    %v658 = vld [vmem:[#allocation5 + $0x1210] sm:$0xff]
    %v659 = vld [vmem:[#allocation5 + $0x1218] sm:$0xff]
    %v660 = vld [vmem:[#allocation5 + $0x1220] sm:$0xff]
    %v661 = vld [vmem:[#allocation5 + $0x1228] sm:$0xff]
    %v662 = vld [vmem:[#allocation5 + $0x1230] sm:$0xff]
    %v663 = vld [vmem:[#allocation5 + $0x1238] sm:$0xff]
    %v664 = vld [vmem:[#allocation5 + $0x1240] sm:$0xff]
    %v665 = vld [vmem:[#allocation5 + $0x1248] sm:$0xff]
    %v666 = vld [vmem:[#allocation5 + $0x1250] sm:$0xff]
    %v667 = vld [vmem:[#allocation5 + $0x1258] sm:$0xff]
    %v668 = vld [vmem:[#allocation5 + $0x1260] sm:$0xff]
    %v669 = vld [vmem:[#allocation5 + $0x1268] sm:$0xff]
    %v670 = vld [vmem:[#allocation5 + $0x1270] sm:$0xff]
    %v671 = vld [vmem:[#allocation5 + $0x1278] sm:$0xff]
    %v672 = vld [vmem:[#allocation5 + $0x1280] sm:$0xff]
    %v673 = vld [vmem:[#allocation5 + $0x1288] sm:$0xff]
    %v674 = vld [vmem:[#allocation5 + $0x1290] sm:$0xff]
    %v675 = vld [vmem:[#allocation5 + $0x1298] sm:$0xff]
    %v676 = vld [vmem:[#allocation5 + $0x12a0] sm:$0xff]
    %v677 = vld [vmem:[#allocation5 + $0x12a8] sm:$0xff]
    %v678 = vld [vmem:[#allocation5 + $0x12b0] sm:$0xff]
    %v679 = vld [vmem:[#allocation5 + $0x12b8] sm:$0xff]
    %v680 = vld [vmem:[#allocation5 + $0x12c0] sm:$0xff]
    %v681 = vld [vmem:[#allocation5 + $0x12c8] sm:$0xff]
    %v682 = vld [vmem:[#allocation5 + $0x12d0] sm:$0xff]
    %v683 = vld [vmem:[#allocation5 + $0x12d8] sm:$0xff]
    %v684 = vld [vmem:[#allocation5 + $0x12e0] sm:$0xff]
    %v685 = vld [vmem:[#allocation5 + $0x12e8] sm:$0xff]
    %v686 = vld [vmem:[#allocation5 + $0x12f0] sm:$0xff]
    %v687 = vld [vmem:[#allocation5 + $0x12f8] sm:$0xff]
    %v688 = vld [vmem:[#allocation5 + $0x1300] sm:$0xff]
    %v689 = vld [vmem:[#allocation5 + $0x1308] sm:$0xff]
    %v690 = vld [vmem:[#allocation5 + $0x1310] sm:$0xff]
    %v691 = vld [vmem:[#allocation5 + $0x1318] sm:$0xff]
    %v692 = vld [vmem:[#allocation5 + $0x1320] sm:$0xff]
    %v693 = vld [vmem:[#allocation5 + $0x1328] sm:$0xff]
    %v694 = vld [vmem:[#allocation5 + $0x1330] sm:$0xff]
    %v695 = vld [vmem:[#allocation5 + $0x1338] sm:$0xff]
    %v696 = vld [vmem:[#allocation5 + $0x1340] sm:$0xff]
    %v697 = vld [vmem:[#allocation5 + $0x1348] sm:$0xff]
    %v698 = vld [vmem:[#allocation5 + $0x1350] sm:$0xff]
    %v699 = vld [vmem:[#allocation5 + $0x1358] sm:$0xff]
    %v700 = vld [vmem:[#allocation5 + $0x1360] sm:$0xff]
    %v701 = vld [vmem:[#allocation5 + $0x1368] sm:$0xff]
    %v702 = vld [vmem:[#allocation5 + $0x1370] sm:$0xff]
    %v703 = vld [vmem:[#allocation5 + $0x1378] sm:$0xff]
    %v704 = vld [vmem:[#allocation5 + $0x1380] sm:$0xff]
    %v705 = vld [vmem:[#allocation5 + $0x1388] sm:$0xff]
    %v706 = vld [vmem:[#allocation5 + $0x1390] sm:$0xff]
    %v707 = vld [vmem:[#allocation5 + $0x1398] sm:$0xff]
    %v708 = vld [vmem:[#allocation5 + $0x13a0] sm:$0xff]
    %v709 = vld [vmem:[#allocation5 + $0x13a8] sm:$0xff]
    %v710 = vld [vmem:[#allocation5 + $0x13b0] sm:$0xff]
    %v711 = vld [vmem:[#allocation5 + $0x13b8] sm:$0xff]
    %v712 = vld [vmem:[#allocation5 + $0x13c0] sm:$0xff]
    %v713 = vld [vmem:[#allocation5 + $0x13c8] sm:$0xff]
    %v714 = vld [vmem:[#allocation5 + $0x13d0] sm:$0xff]
    %v715 = vld [vmem:[#allocation5 + $0x13d8] sm:$0xff]
    %v716 = vld [vmem:[#allocation5 + $0x13e0] sm:$0xff]
    %v717 = vld [vmem:[#allocation5 + $0x13e8] sm:$0xff]
    %v718 = vld [vmem:[#allocation5 + $0x13f0] sm:$0xff]
    %v719 = vld [vmem:[#allocation5 + $0x13f8] sm:$0xff]
    %v720 = vld [vmem:[#allocation5 + $0x1400] sm:$0xff]
    %v721 = vld [vmem:[#allocation5 + $0x1408] sm:$0xff]
    %v722 = vld [vmem:[#allocation5 + $0x1410] sm:$0xff]
    %v723 = vld [vmem:[#allocation5 + $0x1418] sm:$0xff]
    %v724 = vld [vmem:[#allocation5 + $0x1420] sm:$0xff]
    %v725 = vld [vmem:[#allocation5 + $0x1428] sm:$0xff]
    %v726 = vld [vmem:[#allocation5 + $0x1430] sm:$0xff]
    %v727 = vld [vmem:[#allocation5 + $0x1438] sm:$0xff]
    %v728 = vld [vmem:[#allocation5 + $0x1440] sm:$0xff]
    %v729 = vld [vmem:[#allocation5 + $0x1448] sm:$0xff]
    %v730 = vld [vmem:[#allocation5 + $0x1450] sm:$0xff]
    %v731 = vld [vmem:[#allocation5 + $0x1458] sm:$0xff]
    %v732 = vld [vmem:[#allocation5 + $0x1460] sm:$0xff]
    %v733 = vld [vmem:[#allocation5 + $0x1468] sm:$0xff]
    %v734 = vld [vmem:[#allocation5 + $0x1470] sm:$0xff]
    %v735 = vld [vmem:[#allocation5 + $0x1478] sm:$0xff]
    %v736 = vld [vmem:[#allocation5 + $0x1480] sm:$0xff]
    %v737 = vld [vmem:[#allocation5 + $0x1488] sm:$0xff]
    %v738 = vld [vmem:[#allocation5 + $0x1490] sm:$0xff]
    %v739 = vld [vmem:[#allocation5 + $0x1498] sm:$0xff]
    %v740 = vld [vmem:[#allocation5 + $0x14a0] sm:$0xff]
    %v741 = vld [vmem:[#allocation5 + $0x14a8] sm:$0xff]
    %v742 = vld [vmem:[#allocation5 + $0x14b0] sm:$0xff]
    %v743 = vld [vmem:[#allocation5 + $0x14b8] sm:$0xff]
    %v744 = vld [vmem:[#allocation5 + $0x14c0] sm:$0xff]
    %v745 = vld [vmem:[#allocation5 + $0x14c8] sm:$0xff]
    %v746 = vld [vmem:[#allocation5 + $0x14d0] sm:$0xff]
    %v747 = vld [vmem:[#allocation5 + $0x14d8] sm:$0xff]
    %v748 = vld [vmem:[#allocation5 + $0x14e0] sm:$0xff]
    %v749 = vld [vmem:[#allocation5 + $0x14e8] sm:$0xff]
    %v750 = vld [vmem:[#allocation5 + $0x14f0] sm:$0xff]
    %v751 = vld [vmem:[#allocation5 + $0x14f8] sm:$0xff]
    %v752 = vld [vmem:[#allocation5 + $0x1500] sm:$0xff]
    %v753 = vld [vmem:[#allocation5 + $0x1508] sm:$0xff]
    %v754 = vld [vmem:[#allocation5 + $0x1510] sm:$0xff]
    %v755 = vld [vmem:[#allocation5 + $0x1518] sm:$0xff]
    %v756 = vld [vmem:[#allocation5 + $0x1520] sm:$0xff]
    %v757 = vld [vmem:[#allocation5 + $0x1528] sm:$0xff]
    %v758 = vld [vmem:[#allocation5 + $0x1530] sm:$0xff]
    %v759 = vld [vmem:[#allocation5 + $0x1538] sm:$0xff]
    %v760 = vld [vmem:[#allocation5 + $0x1540] sm:$0xff]
    %v761 = vld [vmem:[#allocation5 + $0x1548] sm:$0xff]
    %v762 = vld [vmem:[#allocation5 + $0x1550] sm:$0xff]
    %v763 = vld [vmem:[#allocation5 + $0x1558] sm:$0xff]
    %v764 = vld [vmem:[#allocation5 + $0x1560] sm:$0xff]
    %v765 = vld [vmem:[#allocation5 + $0x1568] sm:$0xff]
    %v766 = vld [vmem:[#allocation5 + $0x1570] sm:$0xff]
    %v767 = vld [vmem:[#allocation5 + $0x1578] sm:$0xff]
    %v768 = vld [vmem:[#allocation5 + $0x1580] sm:$0xff]
    %v769 = vld [vmem:[#allocation5 + $0x1588] sm:$0xff]
    %v770 = vld [vmem:[#allocation5 + $0x1590] sm:$0xff]
    %v771 = vld [vmem:[#allocation5 + $0x1598] sm:$0xff]
    %v772 = vld [vmem:[#allocation5 + $0x15a0] sm:$0xff]
    %v773 = vld [vmem:[#allocation5 + $0x15a8] sm:$0xff]
    %v774 = vld [vmem:[#allocation5 + $0x15b0] sm:$0xff]
    %v775 = vld [vmem:[#allocation5 + $0x15b8] sm:$0xff]
    %v776 = vld [vmem:[#allocation5 + $0x15c0] sm:$0xff]
    %v777 = vld [vmem:[#allocation5 + $0x15c8] sm:$0xff]
    %v778 = vld [vmem:[#allocation5 + $0x15d0] sm:$0xff]
    %v779 = vld [vmem:[#allocation5 + $0x15d8] sm:$0xff]
    %v780 = vld [vmem:[#allocation5 + $0x15e0] sm:$0xff]
    %v781 = vld [vmem:[#allocation5 + $0x15e8] sm:$0xff]
    %v782 = vld [vmem:[#allocation5 + $0x15f0] sm:$0xff]
    %v783 = vld [vmem:[#allocation5 + $0x15f8] sm:$0xff]
    %v784 = vld [vmem:[#allocation5 + $0x1600] sm:$0xff]
    %v785 = vld [vmem:[#allocation5 + $0x1608] sm:$0xff]
    %v786 = vld [vmem:[#allocation5 + $0x1610] sm:$0xff]
    %v787 = vld [vmem:[#allocation5 + $0x1618] sm:$0xff]
    %v788 = vld [vmem:[#allocation5 + $0x1620] sm:$0xff]
    %v789 = vld [vmem:[#allocation5 + $0x1628] sm:$0xff]
    %v790 = vld [vmem:[#allocation5 + $0x1630] sm:$0xff]
    %v791 = vld [vmem:[#allocation5 + $0x1638] sm:$0xff]
    %v792 = vld [vmem:[#allocation5 + $0x1640] sm:$0xff]
    %v793 = vld [vmem:[#allocation5 + $0x1648] sm:$0xff]
    %v794 = vld [vmem:[#allocation5 + $0x1650] sm:$0xff]
    %v795 = vld [vmem:[#allocation5 + $0x1658] sm:$0xff]
    %v796 = vld [vmem:[#allocation5 + $0x1660] sm:$0xff]
    %v797 = vld [vmem:[#allocation5 + $0x1668] sm:$0xff]
    %v798 = vld [vmem:[#allocation5 + $0x1670] sm:$0xff]
    %v799 = vld [vmem:[#allocation5 + $0x1678] sm:$0xff]
    %v800 = vld [vmem:[#allocation5 + $0x1680] sm:$0xff]
    %v801 = vld [vmem:[#allocation5 + $0x1688] sm:$0xff]
    %v802 = vld [vmem:[#allocation5 + $0x1690] sm:$0xff]
    %v803 = vld [vmem:[#allocation5 + $0x1698] sm:$0xff]
    %v804 = vld [vmem:[#allocation5 + $0x16a0] sm:$0xff]
    %v805 = vld [vmem:[#allocation5 + $0x16a8] sm:$0xff]
    %v806 = vld [vmem:[#allocation5 + $0x16b0] sm:$0xff]
    %v807 = vld [vmem:[#allocation5 + $0x16b8] sm:$0xff]
    %v808 = vld [vmem:[#allocation5 + $0x16c0] sm:$0xff]
    %v809 = vld [vmem:[#allocation5 + $0x16c8] sm:$0xff]
    %v810 = vld [vmem:[#allocation5 + $0x16d0] sm:$0xff]
    %v811 = vld [vmem:[#allocation5 + $0x16d8] sm:$0xff]
    %v812 = vld [vmem:[#allocation5 + $0x16e0] sm:$0xff]
    %v813 = vld [vmem:[#allocation5 + $0x16e8] sm:$0xff]
    %v814 = vld [vmem:[#allocation5 + $0x16f0] sm:$0xff]
    %v815 = vld [vmem:[#allocation5 + $0x16f8] sm:$0xff]
    %v816 = vld [vmem:[#allocation5 + $0x1700] sm:$0xff]
    %v817 = vld [vmem:[#allocation5 + $0x1708] sm:$0xff]
    %v818 = vld [vmem:[#allocation5 + $0x1710] sm:$0xff]
    %v819 = vld [vmem:[#allocation5 + $0x1718] sm:$0xff]
    %v820 = vld [vmem:[#allocation5 + $0x1720] sm:$0xff]
    %v821 = vld [vmem:[#allocation5 + $0x1728] sm:$0xff]
    %v822 = vld [vmem:[#allocation5 + $0x1730] sm:$0xff]
    %v823 = vld [vmem:[#allocation5 + $0x1738] sm:$0xff]
    %v824 = vld [vmem:[#allocation5 + $0x1740] sm:$0xff]
    %v825 = vld [vmem:[#allocation5 + $0x1748] sm:$0xff]
    %v826 = vld [vmem:[#allocation5 + $0x1750] sm:$0xff]
    %v827 = vld [vmem:[#allocation5 + $0x1758] sm:$0xff]
    %v828 = vld [vmem:[#allocation5 + $0x1760] sm:$0xff]
    %v829 = vld [vmem:[#allocation5 + $0x1768] sm:$0xff]
    %v830 = vld [vmem:[#allocation5 + $0x1770] sm:$0xff]
    %v831 = vld [vmem:[#allocation5 + $0x1778] sm:$0xff]
    %v832 = vld [vmem:[#allocation5 + $0x1780] sm:$0xff]
    %v833 = vld [vmem:[#allocation5 + $0x1788] sm:$0xff]
    %v834 = vld [vmem:[#allocation5 + $0x1790] sm:$0xff]
    %v835 = vld [vmem:[#allocation5 + $0x1798] sm:$0xff]
    %v836 = vld [vmem:[#allocation5 + $0x17a0] sm:$0xff]
    %v837 = vld [vmem:[#allocation5 + $0x17a8] sm:$0xff]
    %v838 = vld [vmem:[#allocation5 + $0x17b0] sm:$0xff]
    %v839 = vld [vmem:[#allocation5 + $0x17b8] sm:$0xff]
    %v840 = vld [vmem:[#allocation5 + $0x17c0] sm:$0xff]
    %v841 = vld [vmem:[#allocation5 + $0x17c8] sm:$0xff]
    %v842 = vld [vmem:[#allocation5 + $0x17d0] sm:$0xff]
    %v843 = vld [vmem:[#allocation5 + $0x17d8] sm:$0xff]
    %v844 = vld [vmem:[#allocation5 + $0x17e0] sm:$0xff]
    %v845 = vld [vmem:[#allocation5 + $0x17e8] sm:$0xff]
    %v846 = vld [vmem:[#allocation5 + $0x17f0] sm:$0xff]
    %v847 = vld [vmem:[#allocation5 + $0x17f8] sm:$0xff]
    %v848 = vld [vmem:[#allocation5 + $0x1800] sm:$0xff]
    %v849 = vld [vmem:[#allocation5 + $0x1808] sm:$0xff]
    %v850 = vld [vmem:[#allocation5 + $0x1810] sm:$0xff]
    %v851 = vld [vmem:[#allocation5 + $0x1818] sm:$0xff]
    %v852 = vld [vmem:[#allocation5 + $0x1820] sm:$0xff]
    %v853 = vld [vmem:[#allocation5 + $0x1828] sm:$0xff]
    %v854 = vld [vmem:[#allocation5 + $0x1830] sm:$0xff]
    %v855 = vld [vmem:[#allocation5 + $0x1838] sm:$0xff]
    %v856 = vld [vmem:[#allocation5 + $0x1840] sm:$0xff]
    %v857 = vld [vmem:[#allocation5 + $0x1848] sm:$0xff]
    %v858 = vld [vmem:[#allocation5 + $0x1850] sm:$0xff]
    %v859 = vld [vmem:[#allocation5 + $0x1858] sm:$0xff]
    %v860 = vld [vmem:[#allocation5 + $0x1860] sm:$0xff]
    %v861 = vld [vmem:[#allocation5 + $0x1868] sm:$0xff]
    %v862 = vld [vmem:[#allocation5 + $0x1870] sm:$0xff]
    %v863 = vld [vmem:[#allocation5 + $0x1878] sm:$0xff]
    %v864 = vld [vmem:[#allocation5 + $0x1880] sm:$0xff]
    %v865 = vld [vmem:[#allocation5 + $0x1888] sm:$0xff]
    %v866 = vld [vmem:[#allocation5 + $0x1890] sm:$0xff]
    %v867 = vld [vmem:[#allocation5 + $0x1898] sm:$0xff]
    %v868 = vld [vmem:[#allocation5 + $0x18a0] sm:$0xff]
    %v869 = vld [vmem:[#allocation5 + $0x18a8] sm:$0xff]
    %v870 = vld [vmem:[#allocation5 + $0x18b0] sm:$0xff]
    %v871 = vld [vmem:[#allocation5 + $0x18b8] sm:$0xff]
    %v872 = vld [vmem:[#allocation5 + $0x18c0] sm:$0xff]
    %v873 = vld [vmem:[#allocation5 + $0x18c8] sm:$0xff]
    %v874 = vld [vmem:[#allocation5 + $0x18d0] sm:$0xff]
    %v875 = vld [vmem:[#allocation5 + $0x18d8] sm:$0xff]
    %v876 = vld [vmem:[#allocation5 + $0x18e0] sm:$0xff]
    %v877 = vld [vmem:[#allocation5 + $0x18e8] sm:$0xff]
    %v878 = vld [vmem:[#allocation5 + $0x18f0] sm:$0xff]
    %v879 = vld [vmem:[#allocation5 + $0x18f8] sm:$0xff]
    %v880 = vld [vmem:[#allocation5 + $0x1900] sm:$0xff]
    %v881 = vld [vmem:[#allocation5 + $0x1908] sm:$0xff]
    %v882 = vld [vmem:[#allocation5 + $0x1910] sm:$0xff]
    %v883 = vld [vmem:[#allocation5 + $0x1918] sm:$0xff]
    %v884 = vld [vmem:[#allocation5 + $0x1920] sm:$0xff]
    %v885 = vld [vmem:[#allocation5 + $0x1928] sm:$0xff]
    %v886 = vld [vmem:[#allocation5 + $0x1930] sm:$0xff]
    %v887 = vld [vmem:[#allocation5 + $0x1938] sm:$0xff]
    %v888 = vld [vmem:[#allocation5 + $0x1940] sm:$0xff]
    %v889 = vld [vmem:[#allocation5 + $0x1948] sm:$0xff]
    %v890 = vld [vmem:[#allocation5 + $0x1950] sm:$0xff]
    %v891 = vld [vmem:[#allocation5 + $0x1958] sm:$0xff]
    %v892 = vld [vmem:[#allocation5 + $0x1960] sm:$0xff]
    %v893 = vld [vmem:[#allocation5 + $0x1968] sm:$0xff]
    %v894 = vld [vmem:[#allocation5 + $0x1970] sm:$0xff]
    %v895 = vld [vmem:[#allocation5 + $0x1978] sm:$0xff]
    %v896 = vld [vmem:[#allocation5 + $0x1980] sm:$0xff]
    %v897 = vld [vmem:[#allocation5 + $0x1988] sm:$0xff]
    %v898 = vld [vmem:[#allocation5 + $0x1990] sm:$0xff]
    %v899 = vld [vmem:[#allocation5 + $0x1998] sm:$0xff]
    %v900 = vld [vmem:[#allocation5 + $0x19a0] sm:$0xff]
    %v901 = vld [vmem:[#allocation5 + $0x19a8] sm:$0xff]
    %v902 = vld [vmem:[#allocation5 + $0x19b0] sm:$0xff]
    %v903 = vld [vmem:[#allocation5 + $0x19b8] sm:$0xff]
    %v904 = vld [vmem:[#allocation5 + $0x19c0] sm:$0xff]
    %v905 = vld [vmem:[#allocation5 + $0x19c8] sm:$0xff]
    %v906 = vld [vmem:[#allocation5 + $0x19d0] sm:$0xff]
    %v907 = vld [vmem:[#allocation5 + $0x19d8] sm:$0xff]
    %v908 = vld [vmem:[#allocation5 + $0x19e0] sm:$0xff]
    %v909 = vld [vmem:[#allocation5 + $0x19e8] sm:$0xff]
    %v910 = vld [vmem:[#allocation5 + $0x19f0] sm:$0xff]
    %v911 = vld [vmem:[#allocation5 + $0x19f8] sm:$0xff]
    %v912 = vld [vmem:[#allocation5 + $0x1a00] sm:$0xff]
    %v913 = vld [vmem:[#allocation5 + $0x1a08] sm:$0xff]
    %v914 = vld [vmem:[#allocation5 + $0x1a10] sm:$0xff]
    %v915 = vld [vmem:[#allocation5 + $0x1a18] sm:$0xff]
    %v916 = vld [vmem:[#allocation5 + $0x1a20] sm:$0xff]
    %v917 = vld [vmem:[#allocation5 + $0x1a28] sm:$0xff]
    %v918 = vld [vmem:[#allocation5 + $0x1a30] sm:$0xff]
    %v919 = vld [vmem:[#allocation5 + $0x1a38] sm:$0xff]
    %v920 = vld [vmem:[#allocation5 + $0x1a40] sm:$0xff]
    %v921 = vld [vmem:[#allocation5 + $0x1a48] sm:$0xff]
    %v922 = vld [vmem:[#allocation5 + $0x1a50] sm:$0xff]
    %v923 = vld [vmem:[#allocation5 + $0x1a58] sm:$0xff]
    %v924 = vld [vmem:[#allocation5 + $0x1a60] sm:$0xff]
    %v925 = vld [vmem:[#allocation5 + $0x1a68] sm:$0xff]
    %v926 = vld [vmem:[#allocation5 + $0x1a70] sm:$0xff]
    %v927 = vld [vmem:[#allocation5 + $0x1a78] sm:$0xff]
    %v928 = vld [vmem:[#allocation5 + $0x1a80] sm:$0xff]
    %v929 = vld [vmem:[#allocation5 + $0x1a88] sm:$0xff]
    %v930 = vld [vmem:[#allocation5 + $0x1a90] sm:$0xff]
    %v931 = vld [vmem:[#allocation5 + $0x1a98] sm:$0xff]
    %v932 = vld [vmem:[#allocation5 + $0x1aa0] sm:$0xff]
    %v933 = vld [vmem:[#allocation5 + $0x1aa8] sm:$0xff]
    %v934 = vld [vmem:[#allocation5 + $0x1ab0] sm:$0xff]
    %v935 = vld [vmem:[#allocation5 + $0x1ab8] sm:$0xff]
    %v936 = vld [vmem:[#allocation5 + $0x1ac0] sm:$0xff]
    %v937 = vld [vmem:[#allocation5 + $0x1ac8] sm:$0xff]
    %v938 = vld [vmem:[#allocation5 + $0x1ad0] sm:$0xff]
    %v939 = vld [vmem:[#allocation5 + $0x1ad8] sm:$0xff]
    %v940 = vld [vmem:[#allocation5 + $0x1ae0] sm:$0xff]
    %v941 = vld [vmem:[#allocation5 + $0x1ae8] sm:$0xff]
    %v942 = vld [vmem:[#allocation5 + $0x1af0] sm:$0xff]
    %v943 = vld [vmem:[#allocation5 + $0x1af8] sm:$0xff]
    %v944 = vld [vmem:[#allocation5 + $0x1b00] sm:$0xff]
    %v945 = vld [vmem:[#allocation5 + $0x1b08] sm:$0xff]
    %v946 = vld [vmem:[#allocation5 + $0x1b10] sm:$0xff]
    %v947 = vld [vmem:[#allocation5 + $0x1b18] sm:$0xff]
    %v948 = vld [vmem:[#allocation5 + $0x1b20] sm:$0xff]
    %v949 = vld [vmem:[#allocation5 + $0x1b28] sm:$0xff]
    %v950 = vld [vmem:[#allocation5 + $0x1b30] sm:$0xff]
    %v951 = vld [vmem:[#allocation5 + $0x1b38] sm:$0xff]
    %v952 = vld [vmem:[#allocation5 + $0x1b40] sm:$0xff]
    %v953 = vld [vmem:[#allocation5 + $0x1b48] sm:$0xff]
    %v954 = vld [vmem:[#allocation5 + $0x1b50] sm:$0xff]
    %v955 = vld [vmem:[#allocation5 + $0x1b58] sm:$0xff]
    %v956 = vld [vmem:[#allocation5 + $0x1b60] sm:$0xff]
    %v957 = vld [vmem:[#allocation5 + $0x1b68] sm:$0xff]
    %v958 = vld [vmem:[#allocation5 + $0x1b70] sm:$0xff]
    %v959 = vld [vmem:[#allocation5 + $0x1b78] sm:$0xff]
    %v960 = vld [vmem:[#allocation5 + $0x1b80] sm:$0xff]
    %v961 = vld [vmem:[#allocation5 + $0x1b88] sm:$0xff]
    %v962 = vld [vmem:[#allocation5 + $0x1b90] sm:$0xff]
    %v963 = vld [vmem:[#allocation5 + $0x1b98] sm:$0xff]
    %v964 = vld [vmem:[#allocation5 + $0x1ba0] sm:$0xff]
    %v965 = vld [vmem:[#allocation5 + $0x1ba8] sm:$0xff]
    %v966 = vld [vmem:[#allocation5 + $0x1bb0] sm:$0xff]
    %v967 = vld [vmem:[#allocation5 + $0x1bb8] sm:$0xff]
    %v968 = vld [vmem:[#allocation5 + $0x1bc0] sm:$0xff]
    %v969 = vld [vmem:[#allocation5 + $0x1bc8] sm:$0xff]
    %v970 = vld [vmem:[#allocation5 + $0x1bd0] sm:$0xff]
    %v971 = vld [vmem:[#allocation5 + $0x1bd8] sm:$0xff]
    %v972 = vld [vmem:[#allocation5 + $0x1be0] sm:$0xff]
    %v973 = vld [vmem:[#allocation5 + $0x1be8] sm:$0xff]
    %v974 = vld [vmem:[#allocation5 + $0x1bf0] sm:$0xff]
    %v975 = vld [vmem:[#allocation5 + $0x1bf8] sm:$0xff]
    %v976 = vld [vmem:[#allocation5 + $0x1c00] sm:$0xff]
    %v977 = vld [vmem:[#allocation5 + $0x1c08] sm:$0xff]
    %v978 = vld [vmem:[#allocation5 + $0x1c10] sm:$0xff]
    %v979 = vld [vmem:[#allocation5 + $0x1c18] sm:$0xff]
    %v980 = vld [vmem:[#allocation5 + $0x1c20] sm:$0xff]
    %v981 = vld [vmem:[#allocation5 + $0x1c28] sm:$0xff]
    %v982 = vld [vmem:[#allocation5 + $0x1c30] sm:$0xff]
    %v983 = vld [vmem:[#allocation5 + $0x1c38] sm:$0xff]
    %v984 = vld [vmem:[#allocation5 + $0x1c40] sm:$0xff]
    %v985 = vld [vmem:[#allocation5 + $0x1c48] sm:$0xff]
    %v986 = vld [vmem:[#allocation5 + $0x1c50] sm:$0xff]
    %v987 = vld [vmem:[#allocation5 + $0x1c58] sm:$0xff]
    %v988 = vld [vmem:[#allocation5 + $0x1c60] sm:$0xff]
    %v989 = vld [vmem:[#allocation5 + $0x1c68] sm:$0xff]
    %v990 = vld [vmem:[#allocation5 + $0x1c70] sm:$0xff]
    %v991 = vld [vmem:[#allocation5 + $0x1c78] sm:$0xff]
    %v992 = vld [vmem:[#allocation5 + $0x1c80] sm:$0xff]
    %v993 = vld [vmem:[#allocation5 + $0x1c88] sm:$0xff]
    %v994 = vld [vmem:[#allocation5 + $0x1c90] sm:$0xff]
    %v995 = vld [vmem:[#allocation5 + $0x1c98] sm:$0xff]
    %v996 = vld [vmem:[#allocation5 + $0x1ca0] sm:$0xff]
    %v997 = vld [vmem:[#allocation5 + $0x1ca8] sm:$0xff]
    %v998 = vld [vmem:[#allocation5 + $0x1cb0] sm:$0xff]
    %v999 = vld [vmem:[#allocation5 + $0x1cb8] sm:$0xff]
    %v1000 = vld [vmem:[#allocation5 + $0x1cc0] sm:$0xff]
    %v1001 = vld [vmem:[#allocation5 + $0x1cc8] sm:$0xff]
    %v1002 = vld [vmem:[#allocation5 + $0x1cd0] sm:$0xff]
    %v1003 = vld [vmem:[#allocation5 + $0x1cd8] sm:$0xff]
    %v1004 = vld [vmem:[#allocation5 + $0x1ce0] sm:$0xff]
    %v1005 = vld [vmem:[#allocation5 + $0x1ce8] sm:$0xff]
    %v1006 = vld [vmem:[#allocation5 + $0x1cf0] sm:$0xff]
    %v1007 = vld [vmem:[#allocation5 + $0x1cf8] sm:$0xff]
    %v1008 = vld [vmem:[#allocation5 + $0x1d00] sm:$0xff]
    %v1009 = vld [vmem:[#allocation5 + $0x1d08] sm:$0xff]
    %v1010 = vld [vmem:[#allocation5 + $0x1d10] sm:$0xff]
    %v1011 = vld [vmem:[#allocation5 + $0x1d18] sm:$0xff]
    %v1012 = vld [vmem:[#allocation5 + $0x1d20] sm:$0xff]
    %v1013 = vld [vmem:[#allocation5 + $0x1d28] sm:$0xff]
    %v1014 = vld [vmem:[#allocation5 + $0x1d30] sm:$0xff]
    %v1015 = vld [vmem:[#allocation5 + $0x1d38] sm:$0xff]
    %v1016 = vld [vmem:[#allocation5 + $0x1d40] sm:$0xff]
    %v1017 = vld [vmem:[#allocation5 + $0x1d48] sm:$0xff]
    %v1018 = vld [vmem:[#allocation5 + $0x1d50] sm:$0xff]
    %v1019 = vld [vmem:[#allocation5 + $0x1d58] sm:$0xff]
    %v1020 = vld [vmem:[#allocation5 + $0x1d60] sm:$0xff]
    %v1021 = vld [vmem:[#allocation5 + $0x1d68] sm:$0xff]
    %v1022 = vld [vmem:[#allocation5 + $0x1d70] sm:$0xff]
    %v1023 = vld [vmem:[#allocation5 + $0x1d78] sm:$0xff]
    %v1024 = vld [vmem:[#allocation5 + $0x1d80] sm:$0xff]
    %v1025 = vld [vmem:[#allocation5 + $0x1d88] sm:$0xff]
    %v1026 = vld [vmem:[#allocation5 + $0x1d90] sm:$0xff]
    %v1027 = vld [vmem:[#allocation5 + $0x1d98] sm:$0xff]
    %v1028 = vld [vmem:[#allocation5 + $0x1da0] sm:$0xff]
    %v1029 = vld [vmem:[#allocation5 + $0x1da8] sm:$0xff]
    %v1030 = vld [vmem:[#allocation5 + $0x1db0] sm:$0xff]
    %v1031 = vld [vmem:[#allocation5 + $0x1db8] sm:$0xff]
    %v1032 = vld [vmem:[#allocation5 + $0x1dc0] sm:$0xff]
    %v1033 = vld [vmem:[#allocation5 + $0x1dc8] sm:$0xff]
    %v1034 = vld [vmem:[#allocation5 + $0x1dd0] sm:$0xff]
    %v1035 = vld [vmem:[#allocation5 + $0x1dd8] sm:$0xff]
    %v1036 = vld [vmem:[#allocation5 + $0x1de0] sm:$0xff]
    %v1037 = vld [vmem:[#allocation5 + $0x1de8] sm:$0xff]
    %v1038 = vld [vmem:[#allocation5 + $0x1df0] sm:$0xff]
    %v1039 = vld [vmem:[#allocation5 + $0x1df8] sm:$0xff]
    %v1040 = vld [vmem:[#allocation5 + $0x1e00] sm:$0xff]
    %v1041 = vld [vmem:[#allocation5 + $0x1e08] sm:$0xff]
    %v1042 = vld [vmem:[#allocation5 + $0x1e10] sm:$0xff]
    %v1043 = vld [vmem:[#allocation5 + $0x1e18] sm:$0xff]
    %v1044 = vld [vmem:[#allocation5 + $0x1e20] sm:$0xff]
    %v1045 = vld [vmem:[#allocation5 + $0x1e28] sm:$0xff]
    %v1046 = vld [vmem:[#allocation5 + $0x1e30] sm:$0xff]
    %v1047 = vld [vmem:[#allocation5 + $0x1e38] sm:$0xff]
    %v1048 = vld [vmem:[#allocation5 + $0x1e40] sm:$0xff]
    %v1049 = vld [vmem:[#allocation5 + $0x1e48] sm:$0xff]
    %v1050 = vld [vmem:[#allocation5 + $0x1e50] sm:$0xff]
    %v1051 = vld [vmem:[#allocation5 + $0x1e58] sm:$0xff]
    %v1052 = vld [vmem:[#allocation5 + $0x1e60] sm:$0xff]
    %v1053 = vld [vmem:[#allocation5 + $0x1e68] sm:$0xff]
    %v1054 = vld [vmem:[#allocation5 + $0x1e70] sm:$0xff]
    %v1055 = vld [vmem:[#allocation5 + $0x1e78] sm:$0xff]
    %v1056 = vld [vmem:[#allocation5 + $0x1e80] sm:$0xff]
    %v1057 = vld [vmem:[#allocation5 + $0x1e88] sm:$0xff]
    %v1058 = vld [vmem:[#allocation5 + $0x1e90] sm:$0xff]
    %v1059 = vld [vmem:[#allocation5 + $0x1e98] sm:$0xff]
    %v1060 = vld [vmem:[#allocation5 + $0x1ea0] sm:$0xff]
    %v1061 = vld [vmem:[#allocation5 + $0x1ea8] sm:$0xff]
    %v1062 = vld [vmem:[#allocation5 + $0x1eb0] sm:$0xff]
    %v1063 = vld [vmem:[#allocation5 + $0x1eb8] sm:$0xff]
    %v1064 = vld [vmem:[#allocation5 + $0x1ec0] sm:$0xff]
    %v1065 = vld [vmem:[#allocation5 + $0x1ec8] sm:$0xff]
    %v1066 = vld [vmem:[#allocation5 + $0x1ed0] sm:$0xff]
    %v1067 = vld [vmem:[#allocation5 + $0x1ed8] sm:$0xff]
    %v1068 = vld [vmem:[#allocation5 + $0x1ee0] sm:$0xff]
    %v1069 = vld [vmem:[#allocation5 + $0x1ee8] sm:$0xff]
    %v1070 = vld [vmem:[#allocation5 + $0x1ef0] sm:$0xff]
    %v1071 = vld [vmem:[#allocation5 + $0x1ef8] sm:$0xff]
    %v1072 = vld [vmem:[#allocation5 + $0x1f00] sm:$0xff]
    %v1073 = vld [vmem:[#allocation5 + $0x1f08] sm:$0xff]
    %v1074 = vld [vmem:[#allocation5 + $0x1f10] sm:$0xff]
    %v1075 = vld [vmem:[#allocation5 + $0x1f18] sm:$0xff]
    %v1076 = vld [vmem:[#allocation5 + $0x1f20] sm:$0xff]
    %v1077 = vld [vmem:[#allocation5 + $0x1f28] sm:$0xff]
    %v1078 = vld [vmem:[#allocation5 + $0x1f30] sm:$0xff]
    %v1079 = vld [vmem:[#allocation5 + $0x1f38] sm:$0xff]
    %v1080 = vld [vmem:[#allocation5 + $0x1f40] sm:$0xff]
    %v1081 = vld [vmem:[#allocation5 + $0x1f48] sm:$0xff]
    %v1082 = vld [vmem:[#allocation5 + $0x1f50] sm:$0xff]
    %v1083 = vld [vmem:[#allocation5 + $0x1f58] sm:$0xff]
    %v1084 = vld [vmem:[#allocation5 + $0x1f60] sm:$0xff]
    %v1085 = vld [vmem:[#allocation5 + $0x1f68] sm:$0xff]
    %v1086 = vld [vmem:[#allocation5 + $0x1f70] sm:$0xff]
    %v1087 = vld [vmem:[#allocation5 + $0x1f78] sm:$0xff]
    %v1088 = vld [vmem:[#allocation5 + $0x1f80] sm:$0xff]
    %v1089 = vld [vmem:[#allocation5 + $0x1f88] sm:$0xff]
    %v1090 = vld [vmem:[#allocation5 + $0x1f90] sm:$0xff]
    %v1091 = vld [vmem:[#allocation5 + $0x1f98] sm:$0xff]
    %v1092 = vld [vmem:[#allocation5 + $0x1fa0] sm:$0xff]
    %v1093 = vld [vmem:[#allocation5 + $0x1fa8] sm:$0xff]
    %v1094 = vld [vmem:[#allocation5 + $0x1fb0] sm:$0xff]
    %v1095 = vld [vmem:[#allocation5 + $0x1fb8] sm:$0xff]
    %v1096 = vld [vmem:[#allocation5 + $0x1fc0] sm:$0xff]
    %v1097 = vld [vmem:[#allocation5 + $0x1fc8] sm:$0xff]
    %v1098 = vld [vmem:[#allocation5 + $0x1fd0] sm:$0xff]
    %v1099 = vld [vmem:[#allocation5 + $0x1fd8] sm:$0xff]
    %v1100 = vld [vmem:[#allocation5 + $0x1fe0] sm:$0xff]
    %v1101 = vld [vmem:[#allocation5 + $0x1fe8] sm:$0xff]
    %v1102 = vld [vmem:[#allocation5 + $0x1ff0] sm:$0xff]
    %v1103 = vld [vmem:[#allocation5 + $0x1ff8] sm:$0xff]
    %1104 = vmatprep.subr.mxu0 %v81
    %1105 = vmatpush1.msra.mxu0 %v80
    %1106 = vmatprep.subr.mxu0 %v85
    %1107 = vmatpush1.msra.mxu0 %v84
    %1108 = vmatprep.subr.mxu0 %v89
    %1109 = vmatpush1.msra.mxu0 %v88
    %1110 = vmatprep.subr.mxu0 %v93
    %1111 = vmatpush1.msra.mxu0 %v92
    %1112 = vmatprep.subr.mxu0 %v97
    %1113 = vmatpush1.msra.mxu0 %v96
    %1114 = vmatprep.subr.mxu0 %v101
    %1115 = vmatpush1.msra.mxu0 %v100
    %1116 = vmatprep.subr.mxu0 %v105
    %1117 = vmatpush1.msra.mxu0 %v104
    %1118 = vmatprep.subr.mxu0 %v109
    %1119 = vmatpush1.msra.mxu0 %v108
    %1120 = vmatprep.subr.mxu0 %v113
    %1121 = vmatpush1.msra.mxu0 %v112
    %1122 = vmatprep.subr.mxu0 %v117
    %1123 = vmatpush1.msra.mxu0 %v116
    %1124 = vmatprep.subr.mxu0 %v121
    %1125 = vmatpush1.msra.mxu0 %v120
    %1126 = vmatprep.subr.mxu0 %v125
    %1127 = vmatpush1.msra.mxu0 %v124
    %1128 = vmatprep.subr.mxu0 %v129
    %1129 = vmatpush1.msra.mxu0 %v128
    %1130 = vmatprep.subr.mxu0 %v133
    %1131 = vmatpush1.msra.mxu0 %v132
    %1132 = vmatprep.subr.mxu0 %v137
    %1133 = vmatpush1.msra.mxu0 %v136
    %1134 = vmatprep.subr.mxu0 %v141
    %1135 = vmatpush1.msra.mxu0 %v140
    %1136 = vmatprep.subr.mxu0 %v145
    %1137 = vmatpush1.msra.mxu0 %v144
    %1138 = vmatprep.subr.mxu0 %v149
    %1139 = vmatpush1.msra.mxu0 %v148
    %1140 = vmatprep.subr.mxu0 %v153
    %1141 = vmatpush1.msra.mxu0 %v152
    %1142 = vmatprep.subr.mxu0 %v157
    %1143 = vmatpush1.msra.mxu0 %v156
    %1144 = vmatprep.subr.mxu0 %v161
    %1145 = vmatpush1.msra.mxu0 %v160
    %1146 = vmatprep.subr.mxu0 %v165
    %1147 = vmatpush1.msra.mxu0 %v164
    %1148 = vmatprep.subr.mxu0 %v169
    %1149 = vmatpush1.msra.mxu0 %v168
    %1150 = vmatprep.subr.mxu0 %v173
    %1151 = vmatpush1.msra.mxu0 %v172
    %1152 = vmatprep.subr.mxu0 %v177
    %1153 = vmatpush1.msra.mxu0 %v176
    %1154 = vmatprep.subr.mxu0 %v181
    %1155 = vmatpush1.msra.mxu0 %v180
    %1156 = vmatprep.subr.mxu0 %v185
    %1157 = vmatpush1.msra.mxu0 %v184
    %1158 = vmatprep.subr.mxu0 %v189
    %1159 = vmatpush1.msra.mxu0 %v188
    %1160 = vmatprep.subr.mxu0 %v193
    %1161 = vmatpush1.msra.mxu0 %v192
    %1162 = vmatprep.subr.mxu0 %v197
    %1163 = vmatpush1.msra.mxu0 %v196
    %1164 = vmatprep.subr.mxu0 %v201
    %1165 = vmatpush1.msra.mxu0 %v200
    %1166 = vmatprep.subr.mxu0 %v205
    %1167 = vmatpush1.msra.mxu0 %v204
    %1168 = vmatprep.mubr.f32.mxu0 %v65
    %1169 = vmatmul.mubr.f32.gmra.mrb[0].mxu0 %v64
    %v1170 = vpop.f32.mrb[0].mxu0
    %v1171 = vadd.f32 0.0, %v1170
    %v1172 = vpop.f32.mrb[0].mxu0
    %v1173 = vadd.f32 0.0, %v1172
    %1174 = vdwg.mxu0
    %1175 = vmatprep.subr.mxu0 %v209
    %1176 = vmatpush1.msra.mxu0 %v208
    %1177 = vmatprep.subr.mxu0 %v213
    %1178 = vmatpush1.msra.mxu0 %v212
    %1179 = vmatprep.subr.mxu0 %v217
    %1180 = vmatpush1.msra.mxu0 %v216
    %1181 = vmatprep.subr.mxu0 %v221
    %1182 = vmatpush1.msra.mxu0 %v220
    %1183 = vmatprep.subr.mxu0 %v225
    %1184 = vmatpush1.msra.mxu0 %v224
    %1185 = vmatprep.subr.mxu0 %v229
    %1186 = vmatpush1.msra.mxu0 %v228
    %1187 = vmatprep.subr.mxu0 %v233
    %1188 = vmatpush1.msra.mxu0 %v232
    %1189 = vmatprep.subr.mxu0 %v237
    %1190 = vmatpush1.msra.mxu0 %v236
    %1191 = vmatprep.subr.mxu0 %v241
    %1192 = vmatpush1.msra.mxu0 %v240
    %1193 = vmatprep.subr.mxu0 %v245
    %1194 = vmatpush1.msra.mxu0 %v244
    %1195 = vmatprep.subr.mxu0 %v249
    %1196 = vmatpush1.msra.mxu0 %v248
    %1197 = vmatprep.subr.mxu0 %v253
    %1198 = vmatpush1.msra.mxu0 %v252
    %1199 = vmatprep.subr.mxu0 %v257
    %1200 = vmatpush1.msra.mxu0 %v256
    %1201 = vmatprep.subr.mxu0 %v261
    %1202 = vmatpush1.msra.mxu0 %v260
    %1203 = vmatprep.subr.mxu0 %v265
    %1204 = vmatpush1.msra.mxu0 %v264
    %1205 = vmatprep.subr.mxu0 %v269
    %1206 = vmatpush1.msra.mxu0 %v268
    %1207 = vmatprep.subr.mxu0 %v273
    %1208 = vmatpush1.msra.mxu0 %v272
    %1209 = vmatprep.subr.mxu0 %v277
    %1210 = vmatpush1.msra.mxu0 %v276
    %1211 = vmatprep.subr.mxu0 %v281
    %1212 = vmatpush1.msra.mxu0 %v280
    %1213 = vmatprep.subr.mxu0 %v285
    %1214 = vmatpush1.msra.mxu0 %v284
    %1215 = vmatprep.subr.mxu0 %v289
    %1216 = vmatpush1.msra.mxu0 %v288
    %1217 = vmatprep.subr.mxu0 %v293
    %1218 = vmatpush1.msra.mxu0 %v292
    %1219 = vmatprep.subr.mxu0 %v297
    %1220 = vmatpush1.msra.mxu0 %v296
    %1221 = vmatprep.subr.mxu0 %v301
    %1222 = vmatpush1.msra.mxu0 %v300
    %1223 = vmatprep.subr.mxu0 %v305
    %1224 = vmatpush1.msra.mxu0 %v304
    %1225 = vmatprep.subr.mxu0 %v309
    %1226 = vmatpush1.msra.mxu0 %v308
    %1227 = vmatprep.subr.mxu0 %v313
    %1228 = vmatpush1.msra.mxu0 %v312
    %1229 = vmatprep.subr.mxu0 %v317
    %1230 = vmatpush1.msra.mxu0 %v316
    %1231 = vmatprep.subr.mxu0 %v321
    %1232 = vmatpush1.msra.mxu0 %v320
    %1233 = vmatprep.subr.mxu0 %v325
    %1234 = vmatpush1.msra.mxu0 %v324
    %1235 = vmatprep.subr.mxu0 %v329
    %1236 = vmatpush1.msra.mxu0 %v328
    %1237 = vmatprep.subr.mxu0 %v333
    %1238 = vmatpush1.msra.mxu0 %v332
    %1239 = vmatprep.mubr.f32.mxu0 %v67
    %1240 = vmatmul.mubr.f32.gmra.mrb[0].mxu0 %v66
    %v1241 = vpop.f32.mrb[0].mxu0
    %v1242 = vadd.f32 %v1171, %v1241
    %v1243 = vpop.f32.mrb[0].mxu0
    %v1244 = vadd.f32 %v1173, %v1243
    %1245 = vdwg.mxu0
    %1246 = vmatprep.subr.mxu0 %v337
    %1247 = vmatpush1.msra.mxu0 %v336
    %1248 = vmatprep.subr.mxu0 %v341
    %1249 = vmatpush1.msra.mxu0 %v340
    %1250 = vmatprep.subr.mxu0 %v345
    %1251 = vmatpush1.msra.mxu0 %v344
    %1252 = vmatprep.subr.mxu0 %v349
    %1253 = vmatpush1.msra.mxu0 %v348
    %1254 = vmatprep.subr.mxu0 %v353
    %1255 = vmatpush1.msra.mxu0 %v352
    %1256 = vmatprep.subr.mxu0 %v357
    %1257 = vmatpush1.msra.mxu0 %v356
    %1258 = vmatprep.subr.mxu0 %v361
    %1259 = vmatpush1.msra.mxu0 %v360
    %1260 = vmatprep.subr.mxu0 %v365
    %1261 = vmatpush1.msra.mxu0 %v364
    %1262 = vmatprep.subr.mxu0 %v369
    %1263 = vmatpush1.msra.mxu0 %v368
    %1264 = vmatprep.subr.mxu0 %v373
    %1265 = vmatpush1.msra.mxu0 %v372
    %1266 = vmatprep.subr.mxu0 %v377
    %1267 = vmatpush1.msra.mxu0 %v376
    %1268 = vmatprep.subr.mxu0 %v381
    %1269 = vmatpush1.msra.mxu0 %v380
    %1270 = vmatprep.subr.mxu0 %v385
    %1271 = vmatpush1.msra.mxu0 %v384
    %1272 = vmatprep.subr.mxu0 %v389
    %1273 = vmatpush1.msra.mxu0 %v388
    %1274 = vmatprep.subr.mxu0 %v393
    %1275 = vmatpush1.msra.mxu0 %v392
    %1276 = vmatprep.subr.mxu0 %v397
    %1277 = vmatpush1.msra.mxu0 %v396
    %1278 = vmatprep.subr.mxu0 %v401
    %1279 = vmatpush1.msra.mxu0 %v400
    %1280 = vmatprep.subr.mxu0 %v405
    %1281 = vmatpush1.msra.mxu0 %v404
    %1282 = vmatprep.subr.mxu0 %v409
    %1283 = vmatpush1.msra.mxu0 %v408
    %1284 = vmatprep.subr.mxu0 %v413
    %1285 = vmatpush1.msra.mxu0 %v412
    %1286 = vmatprep.subr.mxu0 %v417
    %1287 = vmatpush1.msra.mxu0 %v416
    %1288 = vmatprep.subr.mxu0 %v421
    %1289 = vmatpush1.msra.mxu0 %v420
    %1290 = vmatprep.subr.mxu0 %v425
    %1291 = vmatpush1.msra.mxu0 %v424
    %1292 = vmatprep.subr.mxu0 %v429
    %1293 = vmatpush1.msra.mxu0 %v428
    %1294 = vmatprep.subr.mxu0 %v433
    %1295 = vmatpush1.msra.mxu0 %v432
    %1296 = vmatprep.subr.mxu0 %v437
    %1297 = vmatpush1.msra.mxu0 %v436
    %1298 = vmatprep.subr.mxu0 %v441
    %1299 = vmatpush1.msra.mxu0 %v440
    %1300 = vmatprep.subr.mxu0 %v445
    %1301 = vmatpush1.msra.mxu0 %v444
    %1302 = vmatprep.subr.mxu0 %v449
    %1303 = vmatpush1.msra.mxu0 %v448
    %1304 = vmatprep.subr.mxu0 %v453
    %1305 = vmatpush1.msra.mxu0 %v452
    %1306 = vmatprep.subr.mxu0 %v457
    %1307 = vmatpush1.msra.mxu0 %v456
    %1308 = vmatprep.subr.mxu0 %v461
    %1309 = vmatpush1.msra.mxu0 %v460
    %1310 = vmatprep.mubr.f32.mxu0 %v69
    %1311 = vmatmul.mubr.f32.gmra.mrb[0].mxu0 %v68
    %v1312 = vpop.f32.mrb[0].mxu0
    %v1313 = vadd.f32 %v1242, %v1312
    %v1314 = vpop.f32.mrb[0].mxu0
    %v1315 = vadd.f32 %v1244, %v1314
    %1316 = vdwg.mxu0
    %1317 = vmatprep.subr.mxu0 %v465
    %1318 = vmatpush1.msra.mxu0 %v464
    %1319 = vmatprep.subr.mxu0 %v469
    %1320 = vmatpush1.msra.mxu0 %v468
    %1321 = vmatprep.subr.mxu0 %v473
    %1322 = vmatpush1.msra.mxu0 %v472
    %1323 = vmatprep.subr.mxu0 %v477
    %1324 = vmatpush1.msra.mxu0 %v476
    %1325 = vmatprep.subr.mxu0 %v481
    %1326 = vmatpush1.msra.mxu0 %v480
    %1327 = vmatprep.subr.mxu0 %v485
    %1328 = vmatpush1.msra.mxu0 %v484
    %1329 = vmatprep.subr.mxu0 %v489
    %1330 = vmatpush1.msra.mxu0 %v488
    %1331 = vmatprep.subr.mxu0 %v493
    %1332 = vmatpush1.msra.mxu0 %v492
    %1333 = vmatprep.subr.mxu0 %v497
    %1334 = vmatpush1.msra.mxu0 %v496
    %1335 = vmatprep.subr.mxu0 %v501
    %1336 = vmatpush1.msra.mxu0 %v500
    %1337 = vmatprep.subr.mxu0 %v505
    %1338 = vmatpush1.msra.mxu0 %v504
    %1339 = vmatprep.subr.mxu0 %v509
    %1340 = vmatpush1.msra.mxu0 %v508
    %1341 = vmatprep.subr.mxu0 %v513
    %1342 = vmatpush1.msra.mxu0 %v512
    %1343 = vmatprep.subr.mxu0 %v517
    %1344 = vmatpush1.msra.mxu0 %v516
    %1345 = vmatprep.subr.mxu0 %v521
    %1346 = vmatpush1.msra.mxu0 %v520
    %1347 = vmatprep.subr.mxu0 %v525
    %1348 = vmatpush1.msra.mxu0 %v524
    %1349 = vmatprep.subr.mxu0 %v529
    %1350 = vmatpush1.msra.mxu0 %v528
    %1351 = vmatprep.subr.mxu0 %v533
    %1352 = vmatpush1.msra.mxu0 %v532
    %1353 = vmatprep.subr.mxu0 %v537
    %1354 = vmatpush1.msra.mxu0 %v536
    %1355 = vmatprep.subr.mxu0 %v541
    %1356 = vmatpush1.msra.mxu0 %v540
    %1357 = vmatprep.subr.mxu0 %v545
    %1358 = vmatpush1.msra.mxu0 %v544
    %1359 = vmatprep.subr.mxu0 %v549
    %1360 = vmatpush1.msra.mxu0 %v548
    %1361 = vmatprep.subr.mxu0 %v553
    %1362 = vmatpush1.msra.mxu0 %v552
    %1363 = vmatprep.subr.mxu0 %v557
    %1364 = vmatpush1.msra.mxu0 %v556
    %1365 = vmatprep.subr.mxu0 %v561
    %1366 = vmatpush1.msra.mxu0 %v560
    %1367 = vmatprep.subr.mxu0 %v565
    %1368 = vmatpush1.msra.mxu0 %v564
    %1369 = vmatprep.subr.mxu0 %v569
    %1370 = vmatpush1.msra.mxu0 %v568
    %1371 = vmatprep.subr.mxu0 %v573
    %1372 = vmatpush1.msra.mxu0 %v572
    %1373 = vmatprep.subr.mxu0 %v577
    %1374 = vmatpush1.msra.mxu0 %v576
    %1375 = vmatprep.subr.mxu0 %v581
    %1376 = vmatpush1.msra.mxu0 %v580
    %1377 = vmatprep.subr.mxu0 %v585
    %1378 = vmatpush1.msra.mxu0 %v584
    %1379 = vmatprep.subr.mxu0 %v589
    %1380 = vmatpush1.msra.mxu0 %v588
    %1381 = vmatprep.mubr.f32.mxu0 %v71
    %1382 = vmatmul.mubr.f32.gmra.mrb[0].mxu0 %v70
    %v1383 = vpop.f32.mrb[0].mxu0
    %v1384 = vadd.f32 %v1313, %v1383
    %v1385 = vpop.f32.mrb[0].mxu0
    %v1386 = vadd.f32 %v1315, %v1385
    %1387 = vdwg.mxu0
    %1388 = vmatprep.subr.mxu0 %v593
    %1389 = vmatpush1.msra.mxu0 %v592
    %1390 = vmatprep.subr.mxu0 %v597
    %1391 = vmatpush1.msra.mxu0 %v596
    %1392 = vmatprep.subr.mxu0 %v601
    %1393 = vmatpush1.msra.mxu0 %v600
    %1394 = vmatprep.subr.mxu0 %v605
    %1395 = vmatpush1.msra.mxu0 %v604
    %1396 = vmatprep.subr.mxu0 %v609
    %1397 = vmatpush1.msra.mxu0 %v608
    %1398 = vmatprep.subr.mxu0 %v613
    %1399 = vmatpush1.msra.mxu0 %v612
    %1400 = vmatprep.subr.mxu0 %v617
    %1401 = vmatpush1.msra.mxu0 %v616
    %1402 = vmatprep.subr.mxu0 %v621
    %1403 = vmatpush1.msra.mxu0 %v620
    %1404 = vmatprep.subr.mxu0 %v625
    %1405 = vmatpush1.msra.mxu0 %v624
    %1406 = vmatprep.subr.mxu0 %v629
    %1407 = vmatpush1.msra.mxu0 %v628
    %1408 = vmatprep.subr.mxu0 %v633
    %1409 = vmatpush1.msra.mxu0 %v632
    %1410 = vmatprep.subr.mxu0 %v637
    %1411 = vmatpush1.msra.mxu0 %v636
    %1412 = vmatprep.subr.mxu0 %v641
    %1413 = vmatpush1.msra.mxu0 %v640
    %1414 = vmatprep.subr.mxu0 %v645
    %1415 = vmatpush1.msra.mxu0 %v644
    %1416 = vmatprep.subr.mxu0 %v649
    %1417 = vmatpush1.msra.mxu0 %v648
    %1418 = vmatprep.subr.mxu0 %v653
    %1419 = vmatpush1.msra.mxu0 %v652
    %1420 = vmatprep.subr.mxu0 %v657
    %1421 = vmatpush1.msra.mxu0 %v656
    %1422 = vmatprep.subr.mxu0 %v661
    %1423 = vmatpush1.msra.mxu0 %v660
    %1424 = vmatprep.subr.mxu0 %v665
    %1425 = vmatpush1.msra.mxu0 %v664
    %1426 = vmatprep.subr.mxu0 %v669
    %1427 = vmatpush1.msra.mxu0 %v668
    %1428 = vmatprep.subr.mxu0 %v673
    %1429 = vmatpush1.msra.mxu0 %v672
    %1430 = vmatprep.subr.mxu0 %v677
    %1431 = vmatpush1.msra.mxu0 %v676
    %1432 = vmatprep.subr.mxu0 %v681
    %1433 = vmatpush1.msra.mxu0 %v680
    %1434 = vmatprep.subr.mxu0 %v685
    %1435 = vmatpush1.msra.mxu0 %v684
    %1436 = vmatprep.subr.mxu0 %v689
    %1437 = vmatpush1.msra.mxu0 %v688
    %1438 = vmatprep.subr.mxu0 %v693
    %1439 = vmatpush1.msra.mxu0 %v692
    %1440 = vmatprep.subr.mxu0 %v697
    %1441 = vmatpush1.msra.mxu0 %v696
    %1442 = vmatprep.subr.mxu0 %v701
    %1443 = vmatpush1.msra.mxu0 %v700
    %1444 = vmatprep.subr.mxu0 %v705
    %1445 = vmatpush1.msra.mxu0 %v704
    %1446 = vmatprep.subr.mxu0 %v709
    %1447 = vmatpush1.msra.mxu0 %v708
    %1448 = vmatprep.subr.mxu0 %v713
    %1449 = vmatpush1.msra.mxu0 %v712
    %1450 = vmatprep.subr.mxu0 %v717
    %1451 = vmatpush1.msra.mxu0 %v716
    %1452 = vmatprep.mubr.f32.mxu0 %v73
    %1453 = vmatmul.mubr.f32.gmra.mrb[0].mxu0 %v72
    %v1454 = vpop.f32.mrb[0].mxu0
    %v1455 = vadd.f32 %v1384, %v1454
    %v1456 = vpop.f32.mrb[0].mxu0
    %v1457 = vadd.f32 %v1386, %v1456
    %1458 = vdwg.mxu0
    %1459 = vmatprep.subr.mxu0 %v721
    %1460 = vmatpush1.msra.mxu0 %v720
    %1461 = vmatprep.subr.mxu0 %v725
    %1462 = vmatpush1.msra.mxu0 %v724
    %1463 = vmatprep.subr.mxu0 %v729
    %1464 = vmatpush1.msra.mxu0 %v728
    %1465 = vmatprep.subr.mxu0 %v733
    %1466 = vmatpush1.msra.mxu0 %v732
    %1467 = vmatprep.subr.mxu0 %v737
    %1468 = vmatpush1.msra.mxu0 %v736
    %1469 = vmatprep.subr.mxu0 %v741
    %1470 = vmatpush1.msra.mxu0 %v740
    %1471 = vmatprep.subr.mxu0 %v745
    %1472 = vmatpush1.msra.mxu0 %v744
    %1473 = vmatprep.subr.mxu0 %v749
    %1474 = vmatpush1.msra.mxu0 %v748
    %1475 = vmatprep.subr.mxu0 %v753
    %1476 = vmatpush1.msra.mxu0 %v752
    %1477 = vmatprep.subr.mxu0 %v757
    %1478 = vmatpush1.msra.mxu0 %v756
    %1479 = vmatprep.subr.mxu0 %v761
    %1480 = vmatpush1.msra.mxu0 %v760
    %1481 = vmatprep.subr.mxu0 %v765
    %1482 = vmatpush1.msra.mxu0 %v764
    %1483 = vmatprep.subr.mxu0 %v769
    %1484 = vmatpush1.msra.mxu0 %v768
    %1485 = vmatprep.subr.mxu0 %v773
    %1486 = vmatpush1.msra.mxu0 %v772
    %1487 = vmatprep.subr.mxu0 %v777
    %1488 = vmatpush1.msra.mxu0 %v776
    %1489 = vmatprep.subr.mxu0 %v781
    %1490 = vmatpush1.msra.mxu0 %v780
    %1491 = vmatprep.subr.mxu0 %v785
    %1492 = vmatpush1.msra.mxu0 %v784
    %1493 = vmatprep.subr.mxu0 %v789
    %1494 = vmatpush1.msra.mxu0 %v788
    %1495 = vmatprep.subr.mxu0 %v793
    %1496 = vmatpush1.msra.mxu0 %v792
    %1497 = vmatprep.subr.mxu0 %v797
    %1498 = vmatpush1.msra.mxu0 %v796
    %1499 = vmatprep.subr.mxu0 %v801
    %1500 = vmatpush1.msra.mxu0 %v800
    %1501 = vmatprep.subr.mxu0 %v805
    %1502 = vmatpush1.msra.mxu0 %v804
    %1503 = vmatprep.subr.mxu0 %v809
    %1504 = vmatpush1.msra.mxu0 %v808
    %1505 = vmatprep.subr.mxu0 %v813
    %1506 = vmatpush1.msra.mxu0 %v812
    %1507 = vmatprep.subr.mxu0 %v817
    %1508 = vmatpush1.msra.mxu0 %v816
    %1509 = vmatprep.subr.mxu0 %v821
    %1510 = vmatpush1.msra.mxu0 %v820
    %1511 = vmatprep.subr.mxu0 %v825
    %1512 = vmatpush1.msra.mxu0 %v824
    %1513 = vmatprep.subr.mxu0 %v829
    %1514 = vmatpush1.msra.mxu0 %v828
    %1515 = vmatprep.subr.mxu0 %v833
    %1516 = vmatpush1.msra.mxu0 %v832
    %1517 = vmatprep.subr.mxu0 %v837
    %1518 = vmatpush1.msra.mxu0 %v836
    %1519 = vmatprep.subr.mxu0 %v841
    %1520 = vmatpush1.msra.mxu0 %v840
    %1521 = vmatprep.subr.mxu0 %v845
    %1522 = vmatpush1.msra.mxu0 %v844
    %1523 = vmatprep.mubr.f32.mxu0 %v75
    %1524 = vmatmul.mubr.f32.gmra.mrb[0].mxu0 %v74
    %v1525 = vpop.f32.mrb[0].mxu0
    %v1526 = vadd.f32 %v1455, %v1525
    %v1527 = vpop.f32.mrb[0].mxu0
    %v1528 = vadd.f32 %v1457, %v1527
    %1529 = vdwg.mxu0
    %1530 = vmatprep.subr.mxu0 %v849
    %1531 = vmatpush1.msra.mxu0 %v848
    %1532 = vmatprep.subr.mxu0 %v853
    %1533 = vmatpush1.msra.mxu0 %v852
    %1534 = vmatprep.subr.mxu0 %v857
    %1535 = vmatpush1.msra.mxu0 %v856
    %1536 = vmatprep.subr.mxu0 %v861
    %1537 = vmatpush1.msra.mxu0 %v860
    %1538 = vmatprep.subr.mxu0 %v865
    %1539 = vmatpush1.msra.mxu0 %v864
    %1540 = vmatprep.subr.mxu0 %v869
    %1541 = vmatpush1.msra.mxu0 %v868
    %1542 = vmatprep.subr.mxu0 %v873
    %1543 = vmatpush1.msra.mxu0 %v872
    %1544 = vmatprep.subr.mxu0 %v877
    %1545 = vmatpush1.msra.mxu0 %v876
    %1546 = vmatprep.subr.mxu0 %v881
    %1547 = vmatpush1.msra.mxu0 %v880
    %1548 = vmatprep.subr.mxu0 %v885
    %1549 = vmatpush1.msra.mxu0 %v884
    %1550 = vmatprep.subr.mxu0 %v889
    %1551 = vmatpush1.msra.mxu0 %v888
    %1552 = vmatprep.subr.mxu0 %v893
    %1553 = vmatpush1.msra.mxu0 %v892
    %1554 = vmatprep.subr.mxu0 %v897
    %1555 = vmatpush1.msra.mxu0 %v896
    %1556 = vmatprep.subr.mxu0 %v901
    %1557 = vmatpush1.msra.mxu0 %v900
    %1558 = vmatprep.subr.mxu0 %v905
    %1559 = vmatpush1.msra.mxu0 %v904
    %1560 = vmatprep.subr.mxu0 %v909
    %1561 = vmatpush1.msra.mxu0 %v908
    %1562 = vmatprep.subr.mxu0 %v913
    %1563 = vmatpush1.msra.mxu0 %v912
    %1564 = vmatprep.subr.mxu0 %v917
    %1565 = vmatpush1.msra.mxu0 %v916
    %1566 = vmatprep.subr.mxu0 %v921
    %1567 = vmatpush1.msra.mxu0 %v920
    %1568 = vmatprep.subr.mxu0 %v925
    %1569 = vmatpush1.msra.mxu0 %v924
    %1570 = vmatprep.subr.mxu0 %v929
    %1571 = vmatpush1.msra.mxu0 %v928
    %1572 = vmatprep.subr.mxu0 %v933
    %1573 = vmatpush1.msra.mxu0 %v932
    %1574 = vmatprep.subr.mxu0 %v937
    %1575 = vmatpush1.msra.mxu0 %v936
    %1576 = vmatprep.subr.mxu0 %v941
    %1577 = vmatpush1.msra.mxu0 %v940
    %1578 = vmatprep.subr.mxu0 %v945
    %1579 = vmatpush1.msra.mxu0 %v944
    %1580 = vmatprep.subr.mxu0 %v949
    %1581 = vmatpush1.msra.mxu0 %v948
    %1582 = vmatprep.subr.mxu0 %v953
    %1583 = vmatpush1.msra.mxu0 %v952
    %1584 = vmatprep.subr.mxu0 %v957
    %1585 = vmatpush1.msra.mxu0 %v956
    %1586 = vmatprep.subr.mxu0 %v961
    %1587 = vmatpush1.msra.mxu0 %v960
    %1588 = vmatprep.subr.mxu0 %v965
    %1589 = vmatpush1.msra.mxu0 %v964
    %1590 = vmatprep.subr.mxu0 %v969
    %1591 = vmatpush1.msra.mxu0 %v968
    %1592 = vmatprep.subr.mxu0 %v973
    %1593 = vmatpush1.msra.mxu0 %v972
    %1594 = vmatprep.mubr.f32.mxu0 %v77
    %1595 = vmatmul.mubr.f32.gmra.mrb[0].mxu0 %v76
    %v1596 = vpop.f32.mrb[0].mxu0
    %v1597 = vadd.f32 %v1526, %v1596
    %v1598 = vpop.f32.mrb[0].mxu0
    %v1599 = vadd.f32 %v1528, %v1598
    %1600 = vdwg.mxu0
    %1601 = vmatprep.subr.mxu0 %v977
    %1602 = vmatpush1.msra.mxu0 %v976
    %1603 = vmatprep.subr.mxu0 %v981
    %1604 = vmatpush1.msra.mxu0 %v980
    %1605 = vmatprep.subr.mxu0 %v985
    %1606 = vmatpush1.msra.mxu0 %v984
    %1607 = vmatprep.subr.mxu0 %v989
    %1608 = vmatpush1.msra.mxu0 %v988
    %1609 = vmatprep.subr.mxu0 %v993
    %1610 = vmatpush1.msra.mxu0 %v992
    %1611 = vmatprep.subr.mxu0 %v997
    %1612 = vmatpush1.msra.mxu0 %v996
    %1613 = vmatprep.subr.mxu0 %v1001
    %1614 = vmatpush1.msra.mxu0 %v1000
    %1615 = vmatprep.subr.mxu0 %v1005
    %1616 = vmatpush1.msra.mxu0 %v1004
    %1617 = vmatprep.subr.mxu0 %v1009
    %1618 = vmatpush1.msra.mxu0 %v1008
    %1619 = vmatprep.subr.mxu0 %v1013
    %1620 = vmatpush1.msra.mxu0 %v1012
    %1621 = vmatprep.subr.mxu0 %v1017
    %1622 = vmatpush1.msra.mxu0 %v1016
    %1623 = vmatprep.subr.mxu0 %v1021
    %1624 = vmatpush1.msra.mxu0 %v1020
    %1625 = vmatprep.subr.mxu0 %v1025
    %1626 = vmatpush1.msra.mxu0 %v1024
    %1627 = vmatprep.subr.mxu0 %v1029
    %1628 = vmatpush1.msra.mxu0 %v1028
    %1629 = vmatprep.subr.mxu0 %v1033
    %1630 = vmatpush1.msra.mxu0 %v1032
    %1631 = vmatprep.subr.mxu0 %v1037
    %1632 = vmatpush1.msra.mxu0 %v1036
    %1633 = vmatprep.subr.mxu0 %v1041
    %1634 = vmatpush1.msra.mxu0 %v1040
    %1635 = vmatprep.subr.mxu0 %v1045
    %1636 = vmatpush1.msra.mxu0 %v1044
    %1637 = vmatprep.subr.mxu0 %v1049
    %1638 = vmatpush1.msra.mxu0 %v1048
    %1639 = vmatprep.subr.mxu0 %v1053
    %1640 = vmatpush1.msra.mxu0 %v1052
    %1641 = vmatprep.subr.mxu0 %v1057
    %1642 = vmatpush1.msra.mxu0 %v1056
    %1643 = vmatprep.subr.mxu0 %v1061
    %1644 = vmatpush1.msra.mxu0 %v1060
    %1645 = vmatprep.subr.mxu0 %v1065
    %1646 = vmatpush1.msra.mxu0 %v1064
    %1647 = vmatprep.subr.mxu0 %v1069
    %1648 = vmatpush1.msra.mxu0 %v1068
    %1649 = vmatprep.subr.mxu0 %v1073
    %1650 = vmatpush1.msra.mxu0 %v1072
    %1651 = vmatprep.subr.mxu0 %v1077
    %1652 = vmatpush1.msra.mxu0 %v1076
    %1653 = vmatprep.subr.mxu0 %v1081
    %1654 = vmatpush1.msra.mxu0 %v1080
    %1655 = vmatprep.subr.mxu0 %v1085
    %1656 = vmatpush1.msra.mxu0 %v1084
    %1657 = vmatprep.subr.mxu0 %v1089
    %1658 = vmatpush1.msra.mxu0 %v1088
    %1659 = vmatprep.subr.mxu0 %v1093
    %1660 = vmatpush1.msra.mxu0 %v1092
    %1661 = vmatprep.subr.mxu0 %v1097
    %1662 = vmatpush1.msra.mxu0 %v1096
    %1663 = vmatprep.subr.mxu0 %v1101
    %1664 = vmatpush1.msra.mxu0 %v1100
    %1665 = vmatprep.mubr.f32.mxu0 %v79
    %1666 = vmatmul.mubr.f32.gmra.mrb[0].mxu0 %v78
    %v1667 = vpop.f32.mrb[0].mxu0
    %v1668 = vadd.f32 %v1597, %v1667
    %v1669 = vpop.f32.mrb[0].mxu0
    %v1670 = vadd.f32 %v1599, %v1669
    %1671 = vdwg.mxu0
    %1672 = vmatprep.subr.mxu0 %v83
    %1673 = vmatpush1.msra.mxu0 %v82
    %1674 = vmatprep.subr.mxu0 %v87
    %1675 = vmatpush1.msra.mxu0 %v86
    %1676 = vmatprep.subr.mxu0 %v91
    %1677 = vmatpush1.msra.mxu0 %v90
    %1678 = vmatprep.subr.mxu0 %v95
    %1679 = vmatpush1.msra.mxu0 %v94
    %1680 = vmatprep.subr.mxu0 %v99
    %1681 = vmatpush1.msra.mxu0 %v98
    %1682 = vmatprep.subr.mxu0 %v103
    %1683 = vmatpush1.msra.mxu0 %v102
    %1684 = vmatprep.subr.mxu0 %v107
    %1685 = vmatpush1.msra.mxu0 %v106
    %1686 = vmatprep.subr.mxu0 %v111
    %1687 = vmatpush1.msra.mxu0 %v110
    %1688 = vmatprep.subr.mxu0 %v115
    %1689 = vmatpush1.msra.mxu0 %v114
    %1690 = vmatprep.subr.mxu0 %v119
    %1691 = vmatpush1.msra.mxu0 %v118
    %1692 = vmatprep.subr.mxu0 %v123
    %1693 = vmatpush1.msra.mxu0 %v122
    %1694 = vmatprep.subr.mxu0 %v127
    %1695 = vmatpush1.msra.mxu0 %v126
    %1696 = vmatprep.subr.mxu0 %v131
    %1697 = vmatpush1.msra.mxu0 %v130
    %1698 = vmatprep.subr.mxu0 %v135
    %1699 = vmatpush1.msra.mxu0 %v134
    %1700 = vmatprep.subr.mxu0 %v139
    %1701 = vmatpush1.msra.mxu0 %v138
    %1702 = vmatprep.subr.mxu0 %v143
    %1703 = vmatpush1.msra.mxu0 %v142
    %1704 = vmatprep.subr.mxu0 %v147
    %1705 = vmatpush1.msra.mxu0 %v146
    %1706 = vmatprep.subr.mxu0 %v151
    %1707 = vmatpush1.msra.mxu0 %v150
    %1708 = vmatprep.subr.mxu0 %v155
    %1709 = vmatpush1.msra.mxu0 %v154
    %1710 = vmatprep.subr.mxu0 %v159
    %1711 = vmatpush1.msra.mxu0 %v158
    %1712 = vmatprep.subr.mxu0 %v163
    %1713 = vmatpush1.msra.mxu0 %v162
    %1714 = vmatprep.subr.mxu0 %v167
    %1715 = vmatpush1.msra.mxu0 %v166
    %1716 = vmatprep.subr.mxu0 %v171
    %1717 = vmatpush1.msra.mxu0 %v170
    %1718 = vmatprep.subr.mxu0 %v175
    %1719 = vmatpush1.msra.mxu0 %v174
    %1720 = vmatprep.subr.mxu0 %v179
    %1721 = vmatpush1.msra.mxu0 %v178
    %1722 = vmatprep.subr.mxu0 %v183
    %1723 = vmatpush1.msra.mxu0 %v182
    %1724 = vmatprep.subr.mxu0 %v187
    %1725 = vmatpush1.msra.mxu0 %v186
    %1726 = vmatprep.subr.mxu0 %v191
    %1727 = vmatpush1.msra.mxu0 %v190
    %1728 = vmatprep.subr.mxu0 %v195
    %1729 = vmatpush1.msra.mxu0 %v194
    %1730 = vmatprep.subr.mxu0 %v199
    %1731 = vmatpush1.msra.mxu0 %v198
    %1732 = vmatprep.subr.mxu0 %v203
    %1733 = vmatpush1.msra.mxu0 %v202
    %1734 = vmatprep.subr.mxu0 %v207
    %1735 = vmatpush1.msra.mxu0 %v206
    %1736 = vmatprep.mubr.f32.mxu0 %v65
    %1737 = vmatmul.mubr.f32.gmra.mrb[0].mxu0 %v64
    %v1738 = vpop.f32.mrb[0].mxu0
    %v1739 = vadd.f32 0.0, %v1738
    %v1740 = vpop.f32.mrb[0].mxu0
    %v1741 = vadd.f32 0.0, %v1740
    %1742 = vdwg.mxu0
    %1743 = vmatprep.subr.mxu0 %v211
    %1744 = vmatpush1.msra.mxu0 %v210
    %1745 = vmatprep.subr.mxu0 %v215
    %1746 = vmatpush1.msra.mxu0 %v214
    %1747 = vmatprep.subr.mxu0 %v219
    %1748 = vmatpush1.msra.mxu0 %v218
    %1749 = vmatprep.subr.mxu0 %v223
    %1750 = vmatpush1.msra.mxu0 %v222
    %1751 = vmatprep.subr.mxu0 %v227
    %1752 = vmatpush1.msra.mxu0 %v226
    %1753 = vmatprep.subr.mxu0 %v231
    %1754 = vmatpush1.msra.mxu0 %v230
    %1755 = vmatprep.subr.mxu0 %v235
    %1756 = vmatpush1.msra.mxu0 %v234
    %1757 = vmatprep.subr.mxu0 %v239
    %1758 = vmatpush1.msra.mxu0 %v238
    %1759 = vmatprep.subr.mxu0 %v243
    %1760 = vmatpush1.msra.mxu0 %v242
    %1761 = vmatprep.subr.mxu0 %v247
    %1762 = vmatpush1.msra.mxu0 %v246
    %1763 = vmatprep.subr.mxu0 %v251
    %1764 = vmatpush1.msra.mxu0 %v250
    %1765 = vmatprep.subr.mxu0 %v255
    %1766 = vmatpush1.msra.mxu0 %v254
    %1767 = vmatprep.subr.mxu0 %v259
    %1768 = vmatpush1.msra.mxu0 %v258
    %1769 = vmatprep.subr.mxu0 %v263
    %1770 = vmatpush1.msra.mxu0 %v262
    %1771 = vmatprep.subr.mxu0 %v267
    %1772 = vmatpush1.msra.mxu0 %v266
    %1773 = vmatprep.subr.mxu0 %v271
    %1774 = vmatpush1.msra.mxu0 %v270
    %1775 = vmatprep.subr.mxu0 %v275
    %1776 = vmatpush1.msra.mxu0 %v274
    %1777 = vmatprep.subr.mxu0 %v279
    %1778 = vmatpush1.msra.mxu0 %v278
    %1779 = vmatprep.subr.mxu0 %v283
    %1780 = vmatpush1.msra.mxu0 %v282
    %1781 = vmatprep.subr.mxu0 %v287
    %1782 = vmatpush1.msra.mxu0 %v286
    %1783 = vmatprep.subr.mxu0 %v291
    %1784 = vmatpush1.msra.mxu0 %v290
    %1785 = vmatprep.subr.mxu0 %v295
    %1786 = vmatpush1.msra.mxu0 %v294
    %1787 = vmatprep.subr.mxu0 %v299
    %1788 = vmatpush1.msra.mxu0 %v298
    %1789 = vmatprep.subr.mxu0 %v303
    %1790 = vmatpush1.msra.mxu0 %v302
    %1791 = vmatprep.subr.mxu0 %v307
    %1792 = vmatpush1.msra.mxu0 %v306
    %1793 = vmatprep.subr.mxu0 %v311
    %1794 = vmatpush1.msra.mxu0 %v310
    %1795 = vmatprep.subr.mxu0 %v315
    %1796 = vmatpush1.msra.mxu0 %v314
    %1797 = vmatprep.subr.mxu0 %v319
    %1798 = vmatpush1.msra.mxu0 %v318
    %1799 = vmatprep.subr.mxu0 %v323
    %1800 = vmatpush1.msra.mxu0 %v322
    %1801 = vmatprep.subr.mxu0 %v327
    %1802 = vmatpush1.msra.mxu0 %v326
    %1803 = vmatprep.subr.mxu0 %v331
    %1804 = vmatpush1.msra.mxu0 %v330
    %1805 = vmatprep.subr.mxu0 %v335
    %1806 = vmatpush1.msra.mxu0 %v334
    %1807 = vmatprep.mubr.f32.mxu0 %v67
    %1808 = vmatmul.mubr.f32.gmra.mrb[0].mxu0 %v66
    %v1809 = vpop.f32.mrb[0].mxu0
    %v1810 = vadd.f32 %v1739, %v1809
    %v1811 = vpop.f32.mrb[0].mxu0
    %v1812 = vadd.f32 %v1741, %v1811
    %1813 = vdwg.mxu0
    %1814 = vmatprep.subr.mxu0 %v339
    %1815 = vmatpush1.msra.mxu0 %v338
    %1816 = vmatprep.subr.mxu0 %v343
    %1817 = vmatpush1.msra.mxu0 %v342
    %1818 = vmatprep.subr.mxu0 %v347
    %1819 = vmatpush1.msra.mxu0 %v346
    %1820 = vmatprep.subr.mxu0 %v351
    %1821 = vmatpush1.msra.mxu0 %v350
    %1822 = vmatprep.subr.mxu0 %v355
    %1823 = vmatpush1.msra.mxu0 %v354
    %1824 = vmatprep.subr.mxu0 %v359
    %1825 = vmatpush1.msra.mxu0 %v358
    %1826 = vmatprep.subr.mxu0 %v363
    %1827 = vmatpush1.msra.mxu0 %v362
    %1828 = vmatprep.subr.mxu0 %v367
    %1829 = vmatpush1.msra.mxu0 %v366
    %1830 = vmatprep.subr.mxu0 %v371
    %1831 = vmatpush1.msra.mxu0 %v370
    %1832 = vmatprep.subr.mxu0 %v375
    %1833 = vmatpush1.msra.mxu0 %v374
    %1834 = vmatprep.subr.mxu0 %v379
    %1835 = vmatpush1.msra.mxu0 %v378
    %1836 = vmatprep.subr.mxu0 %v383
    %1837 = vmatpush1.msra.mxu0 %v382
    %1838 = vmatprep.subr.mxu0 %v387
    %1839 = vmatpush1.msra.mxu0 %v386
    %1840 = vmatprep.subr.mxu0 %v391
    %1841 = vmatpush1.msra.mxu0 %v390
    %1842 = vmatprep.subr.mxu0 %v395
    %1843 = vmatpush1.msra.mxu0 %v394
    %1844 = vmatprep.subr.mxu0 %v399
    %1845 = vmatpush1.msra.mxu0 %v398
    %1846 = vmatprep.subr.mxu0 %v403
    %1847 = vmatpush1.msra.mxu0 %v402
    %1848 = vmatprep.subr.mxu0 %v407
    %1849 = vmatpush1.msra.mxu0 %v406
    %1850 = vmatprep.subr.mxu0 %v411
    %1851 = vmatpush1.msra.mxu0 %v410
    %1852 = vmatprep.subr.mxu0 %v415
    %1853 = vmatpush1.msra.mxu0 %v414
    %1854 = vmatprep.subr.mxu0 %v419
    %1855 = vmatpush1.msra.mxu0 %v418
    %1856 = vmatprep.subr.mxu0 %v423
    %1857 = vmatpush1.msra.mxu0 %v422
    %1858 = vmatprep.subr.mxu0 %v427
    %1859 = vmatpush1.msra.mxu0 %v426
    %1860 = vmatprep.subr.mxu0 %v431
    %1861 = vmatpush1.msra.mxu0 %v430
    %1862 = vmatprep.subr.mxu0 %v435
    %1863 = vmatpush1.msra.mxu0 %v434
    %1864 = vmatprep.subr.mxu0 %v439
    %1865 = vmatpush1.msra.mxu0 %v438
    %1866 = vmatprep.subr.mxu0 %v443
    %1867 = vmatpush1.msra.mxu0 %v442
    %1868 = vmatprep.subr.mxu0 %v447
    %1869 = vmatpush1.msra.mxu0 %v446
    %1870 = vmatprep.subr.mxu0 %v451
    %1871 = vmatpush1.msra.mxu0 %v450
    %1872 = vmatprep.subr.mxu0 %v455
    %1873 = vmatpush1.msra.mxu0 %v454
    %1874 = vmatprep.subr.mxu0 %v459
    %1875 = vmatpush1.msra.mxu0 %v458
    %1876 = vmatprep.subr.mxu0 %v463
    %1877 = vmatpush1.msra.mxu0 %v462
    %1878 = vmatprep.mubr.f32.mxu0 %v69
    %1879 = vmatmul.mubr.f32.gmra.mrb[0].mxu0 %v68
    %v1880 = vpop.f32.mrb[0].mxu0
    %v1881 = vadd.f32 %v1810, %v1880
    %v1882 = vpop.f32.mrb[0].mxu0
    %v1883 = vadd.f32 %v1812, %v1882
    %1884 = vdwg.mxu0
    %1885 = vmatprep.subr.mxu0 %v467
    %1886 = vmatpush1.msra.mxu0 %v466
    %1887 = vmatprep.subr.mxu0 %v471
    %1888 = vmatpush1.msra.mxu0 %v470
    %1889 = vmatprep.subr.mxu0 %v475
    %1890 = vmatpush1.msra.mxu0 %v474
    %1891 = vmatprep.subr.mxu0 %v479
    %1892 = vmatpush1.msra.mxu0 %v478
    %1893 = vmatprep.subr.mxu0 %v483
    %1894 = vmatpush1.msra.mxu0 %v482
    %1895 = vmatprep.subr.mxu0 %v487
    %1896 = vmatpush1.msra.mxu0 %v486
    %1897 = vmatprep.subr.mxu0 %v491
    %1898 = vmatpush1.msra.mxu0 %v490
    %1899 = vmatprep.subr.mxu0 %v495
    %1900 = vmatpush1.msra.mxu0 %v494
    %1901 = vmatprep.subr.mxu0 %v499
    %1902 = vmatpush1.msra.mxu0 %v498
    %1903 = vmatprep.subr.mxu0 %v503
    %1904 = vmatpush1.msra.mxu0 %v502
    %1905 = vmatprep.subr.mxu0 %v507
    %1906 = vmatpush1.msra.mxu0 %v506
    %1907 = vmatprep.subr.mxu0 %v511
    %1908 = vmatpush1.msra.mxu0 %v510
    %1909 = vmatprep.subr.mxu0 %v515
    %1910 = vmatpush1.msra.mxu0 %v514
    %1911 = vmatprep.subr.mxu0 %v519
    %1912 = vmatpush1.msra.mxu0 %v518
    %1913 = vmatprep.subr.mxu0 %v523
    %1914 = vmatpush1.msra.mxu0 %v522
    %1915 = vmatprep.subr.mxu0 %v527
    %1916 = vmatpush1.msra.mxu0 %v526
    %1917 = vmatprep.subr.mxu0 %v531
    %1918 = vmatpush1.msra.mxu0 %v530
    %1919 = vmatprep.subr.mxu0 %v535
    %1920 = vmatpush1.msra.mxu0 %v534
    %1921 = vmatprep.subr.mxu0 %v539
    %1922 = vmatpush1.msra.mxu0 %v538
    %1923 = vmatprep.subr.mxu0 %v543
    %1924 = vmatpush1.msra.mxu0 %v542
    %1925 = vmatprep.subr.mxu0 %v547
    %1926 = vmatpush1.msra.mxu0 %v546
    %1927 = vmatprep.subr.mxu0 %v551
    %1928 = vmatpush1.msra.mxu0 %v550
    %1929 = vmatprep.subr.mxu0 %v555
    %1930 = vmatpush1.msra.mxu0 %v554
    %1931 = vmatprep.subr.mxu0 %v559
    %1932 = vmatpush1.msra.mxu0 %v558
    %1933 = vmatprep.subr.mxu0 %v563
    %1934 = vmatpush1.msra.mxu0 %v562
    %1935 = vmatprep.subr.mxu0 %v567
    %1936 = vmatpush1.msra.mxu0 %v566
    %1937 = vmatprep.subr.mxu0 %v571
    %1938 = vmatpush1.msra.mxu0 %v570
    %1939 = vmatprep.subr.mxu0 %v575
    %1940 = vmatpush1.msra.mxu0 %v574
    %1941 = vmatprep.subr.mxu0 %v579
    %1942 = vmatpush1.msra.mxu0 %v578
    %1943 = vmatprep.subr.mxu0 %v583
    %1944 = vmatpush1.msra.mxu0 %v582
    %1945 = vmatprep.subr.mxu0 %v587
    %1946 = vmatpush1.msra.mxu0 %v586
    %1947 = vmatprep.subr.mxu0 %v591
    %1948 = vmatpush1.msra.mxu0 %v590
    %1949 = vmatprep.mubr.f32.mxu0 %v71
    %1950 = vmatmul.mubr.f32.gmra.mrb[0].mxu0 %v70
    %v1951 = vpop.f32.mrb[0].mxu0
    %v1952 = vadd.f32 %v1881, %v1951
    %v1953 = vpop.f32.mrb[0].mxu0
    %v1954 = vadd.f32 %v1883, %v1953
    %1955 = vdwg.mxu0
    %1956 = vmatprep.subr.mxu0 %v595
    %1957 = vmatpush1.msra.mxu0 %v594
    %1958 = vmatprep.subr.mxu0 %v599
    %1959 = vmatpush1.msra.mxu0 %v598
    %1960 = vmatprep.subr.mxu0 %v603
    %1961 = vmatpush1.msra.mxu0 %v602
    %1962 = vmatprep.subr.mxu0 %v607
    %1963 = vmatpush1.msra.mxu0 %v606
    %1964 = vmatprep.subr.mxu0 %v611
    %1965 = vmatpush1.msra.mxu0 %v610
    %1966 = vmatprep.subr.mxu0 %v615
    %1967 = vmatpush1.msra.mxu0 %v614
    %1968 = vmatprep.subr.mxu0 %v619
    %1969 = vmatpush1.msra.mxu0 %v618
    %1970 = vmatprep.subr.mxu0 %v623
    %1971 = vmatpush1.msra.mxu0 %v622
    %1972 = vmatprep.subr.mxu0 %v627
    %1973 = vmatpush1.msra.mxu0 %v626
    %1974 = vmatprep.subr.mxu0 %v631
    %1975 = vmatpush1.msra.mxu0 %v630
    %1976 = vmatprep.subr.mxu0 %v635
    %1977 = vmatpush1.msra.mxu0 %v634
    %1978 = vmatprep.subr.mxu0 %v639
    %1979 = vmatpush1.msra.mxu0 %v638
    %1980 = vmatprep.subr.mxu0 %v643
    %1981 = vmatpush1.msra.mxu0 %v642
    %1982 = vmatprep.subr.mxu0 %v647
    %1983 = vmatpush1.msra.mxu0 %v646
    %1984 = vmatprep.subr.mxu0 %v651
    %1985 = vmatpush1.msra.mxu0 %v650
    %1986 = vmatprep.subr.mxu0 %v655
    %1987 = vmatpush1.msra.mxu0 %v654
    %1988 = vmatprep.subr.mxu0 %v659
    %1989 = vmatpush1.msra.mxu0 %v658
    %1990 = vmatprep.subr.mxu0 %v663
    %1991 = vmatpush1.msra.mxu0 %v662
    %1992 = vmatprep.subr.mxu0 %v667
    %1993 = vmatpush1.msra.mxu0 %v666
    %1994 = vmatprep.subr.mxu0 %v671
    %1995 = vmatpush1.msra.mxu0 %v670
    %1996 = vmatprep.subr.mxu0 %v675
    %1997 = vmatpush1.msra.mxu0 %v674
    %1998 = vmatprep.subr.mxu0 %v679
    %1999 = vmatpush1.msra.mxu0 %v678
    %2000 = vmatprep.subr.mxu0 %v683
    %2001 = vmatpush1.msra.mxu0 %v682
    %2002 = vmatprep.subr.mxu0 %v687
    %2003 = vmatpush1.msra.mxu0 %v686
    %2004 = vmatprep.subr.mxu0 %v691
    %2005 = vmatpush1.msra.mxu0 %v690
    %2006 = vmatprep.subr.mxu0 %v695
    %2007 = vmatpush1.msra.mxu0 %v694
    %2008 = vmatprep.subr.mxu0 %v699
    %2009 = vmatpush1.msra.mxu0 %v698
    %2010 = vmatprep.subr.mxu0 %v703
    %2011 = vmatpush1.msra.mxu0 %v702
    %2012 = vmatprep.subr.mxu0 %v707
    %2013 = vmatpush1.msra.mxu0 %v706
    %2014 = vmatprep.subr.mxu0 %v711
    %2015 = vmatpush1.msra.mxu0 %v710
    %2016 = vmatprep.subr.mxu0 %v715
    %2017 = vmatpush1.msra.mxu0 %v714
    %2018 = vmatprep.subr.mxu0 %v719
    %2019 = vmatpush1.msra.mxu0 %v718
    %2020 = vmatprep.mubr.f32.mxu0 %v73
    %2021 = vmatmul.mubr.f32.gmra.mrb[0].mxu0 %v72
    %v2022 = vpop.f32.mrb[0].mxu0
    %v2023 = vadd.f32 %v1952, %v2022
    %v2024 = vpop.f32.mrb[0].mxu0
    %v2025 = vadd.f32 %v1954, %v2024
    %2026 = vdwg.mxu0
    %2027 = vmatprep.subr.mxu0 %v723
    %2028 = vmatpush1.msra.mxu0 %v722
    %2029 = vmatprep.subr.mxu0 %v727
    %2030 = vmatpush1.msra.mxu0 %v726
    %2031 = vmatprep.subr.mxu0 %v731
    %2032 = vmatpush1.msra.mxu0 %v730
    %2033 = vmatprep.subr.mxu0 %v735
    %2034 = vmatpush1.msra.mxu0 %v734
    %2035 = vmatprep.subr.mxu0 %v739
    %2036 = vmatpush1.msra.mxu0 %v738
    %2037 = vmatprep.subr.mxu0 %v743
    %2038 = vmatpush1.msra.mxu0 %v742
    %2039 = vmatprep.subr.mxu0 %v747
    %2040 = vmatpush1.msra.mxu0 %v746
    %2041 = vmatprep.subr.mxu0 %v751
    %2042 = vmatpush1.msra.mxu0 %v750
    %2043 = vmatprep.subr.mxu0 %v755
    %2044 = vmatpush1.msra.mxu0 %v754
    %2045 = vmatprep.subr.mxu0 %v759
    %2046 = vmatpush1.msra.mxu0 %v758
    %2047 = vmatprep.subr.mxu0 %v763
    %2048 = vmatpush1.msra.mxu0 %v762
    %2049 = vmatprep.subr.mxu0 %v767
    %2050 = vmatpush1.msra.mxu0 %v766
    %2051 = vmatprep.subr.mxu0 %v771
    %2052 = vmatpush1.msra.mxu0 %v770
    %2053 = vmatprep.subr.mxu0 %v775
    %2054 = vmatpush1.msra.mxu0 %v774
    %2055 = vmatprep.subr.mxu0 %v779
    %2056 = vmatpush1.msra.mxu0 %v778
    %2057 = vmatprep.subr.mxu0 %v783
    %2058 = vmatpush1.msra.mxu0 %v782
    %2059 = vmatprep.subr.mxu0 %v787
    %2060 = vmatpush1.msra.mxu0 %v786
    %2061 = vmatprep.subr.mxu0 %v791
    %2062 = vmatpush1.msra.mxu0 %v790
    %2063 = vmatprep.subr.mxu0 %v795
    %2064 = vmatpush1.msra.mxu0 %v794
    %2065 = vmatprep.subr.mxu0 %v799
    %2066 = vmatpush1.msra.mxu0 %v798
    %2067 = vmatprep.subr.mxu0 %v803
    %2068 = vmatpush1.msra.mxu0 %v802
    %2069 = vmatprep.subr.mxu0 %v807
    %2070 = vmatpush1.msra.mxu0 %v806
    %2071 = vmatprep.subr.mxu0 %v811
    %2072 = vmatpush1.msra.mxu0 %v810
    %2073 = vmatprep.subr.mxu0 %v815
    %2074 = vmatpush1.msra.mxu0 %v814
    %2075 = vmatprep.subr.mxu0 %v819
    %2076 = vmatpush1.msra.mxu0 %v818
    %2077 = vmatprep.subr.mxu0 %v823
    %2078 = vmatpush1.msra.mxu0 %v822
    %2079 = vmatprep.subr.mxu0 %v827
    %2080 = vmatpush1.msra.mxu0 %v826
    %2081 = vmatprep.subr.mxu0 %v831
    %2082 = vmatpush1.msra.mxu0 %v830
    %2083 = vmatprep.subr.mxu0 %v835
    %2084 = vmatpush1.msra.mxu0 %v834
    %2085 = vmatprep.subr.mxu0 %v839
    %2086 = vmatpush1.msra.mxu0 %v838
    %2087 = vmatprep.subr.mxu0 %v843
    %2088 = vmatpush1.msra.mxu0 %v842
    %2089 = vmatprep.subr.mxu0 %v847
    %2090 = vmatpush1.msra.mxu0 %v846
    %2091 = vmatprep.mubr.f32.mxu0 %v75
    %2092 = vmatmul.mubr.f32.gmra.mrb[0].mxu0 %v74
    %v2093 = vpop.f32.mrb[0].mxu0
    %v2094 = vadd.f32 %v2023, %v2093
    %v2095 = vpop.f32.mrb[0].mxu0
    %v2096 = vadd.f32 %v2025, %v2095
    %2097 = vdwg.mxu0
    %2098 = vmatprep.subr.mxu0 %v851
    %2099 = vmatpush1.msra.mxu0 %v850
    %2100 = vmatprep.subr.mxu0 %v855
    %2101 = vmatpush1.msra.mxu0 %v854
    %2102 = vmatprep.subr.mxu0 %v859
    %2103 = vmatpush1.msra.mxu0 %v858
    %2104 = vmatprep.subr.mxu0 %v863
    %2105 = vmatpush1.msra.mxu0 %v862
    %2106 = vmatprep.subr.mxu0 %v867
    %2107 = vmatpush1.msra.mxu0 %v866
    %2108 = vmatprep.subr.mxu0 %v871
    %2109 = vmatpush1.msra.mxu0 %v870
    %2110 = vmatprep.subr.mxu0 %v875
    %2111 = vmatpush1.msra.mxu0 %v874
    %2112 = vmatprep.subr.mxu0 %v879
    %2113 = vmatpush1.msra.mxu0 %v878
    %2114 = vmatprep.subr.mxu0 %v883
    %2115 = vmatpush1.msra.mxu0 %v882
    %2116 = vmatprep.subr.mxu0 %v887
    %2117 = vmatpush1.msra.mxu0 %v886
    %2118 = vmatprep.subr.mxu0 %v891
    %2119 = vmatpush1.msra.mxu0 %v890
    %2120 = vmatprep.subr.mxu0 %v895
    %2121 = vmatpush1.msra.mxu0 %v894
    %2122 = vmatprep.subr.mxu0 %v899
    %2123 = vmatpush1.msra.mxu0 %v898
    %2124 = vmatprep.subr.mxu0 %v903
    %2125 = vmatpush1.msra.mxu0 %v902
    %2126 = vmatprep.subr.mxu0 %v907
    %2127 = vmatpush1.msra.mxu0 %v906
    %2128 = vmatprep.subr.mxu0 %v911
    %2129 = vmatpush1.msra.mxu0 %v910
    %2130 = vmatprep.subr.mxu0 %v915
    %2131 = vmatpush1.msra.mxu0 %v914
    %2132 = vmatprep.subr.mxu0 %v919
    %2133 = vmatpush1.msra.mxu0 %v918
    %2134 = vmatprep.subr.mxu0 %v923
    %2135 = vmatpush1.msra.mxu0 %v922
    %2136 = vmatprep.subr.mxu0 %v927
    %2137 = vmatpush1.msra.mxu0 %v926
    %2138 = vmatprep.subr.mxu0 %v931
    %2139 = vmatpush1.msra.mxu0 %v930
    %2140 = vmatprep.subr.mxu0 %v935
    %2141 = vmatpush1.msra.mxu0 %v934
    %2142 = vmatprep.subr.mxu0 %v939
    %2143 = vmatpush1.msra.mxu0 %v938
    %2144 = vmatprep.subr.mxu0 %v943
    %2145 = vmatpush1.msra.mxu0 %v942
    %2146 = vmatprep.subr.mxu0 %v947
    %2147 = vmatpush1.msra.mxu0 %v946
    %2148 = vmatprep.subr.mxu0 %v951
    %2149 = vmatpush1.msra.mxu0 %v950
    %2150 = vmatprep.subr.mxu0 %v955
    %2151 = vmatpush1.msra.mxu0 %v954
    %2152 = vmatprep.subr.mxu0 %v959
    %2153 = vmatpush1.msra.mxu0 %v958
    %2154 = vmatprep.subr.mxu0 %v963
    %2155 = vmatpush1.msra.mxu0 %v962
    %2156 = vmatprep.subr.mxu0 %v967
    %2157 = vmatpush1.msra.mxu0 %v966
    %2158 = vmatprep.subr.mxu0 %v971
    %2159 = vmatpush1.msra.mxu0 %v970
    %2160 = vmatprep.subr.mxu0 %v975
    %2161 = vmatpush1.msra.mxu0 %v974
    %2162 = vmatprep.mubr.f32.mxu0 %v77
    %2163 = vmatmul.mubr.f32.gmra.mrb[0].mxu0 %v76
    %v2164 = vpop.f32.mrb[0].mxu0
    %v2165 = vadd.f32 %v2094, %v2164
    %v2166 = vpop.f32.mrb[0].mxu0
    %v2167 = vadd.f32 %v2096, %v2166
    %2168 = vdwg.mxu0
    %2169 = vmatprep.subr.mxu0 %v979
    %2170 = vmatpush1.msra.mxu0 %v978
    %2171 = vmatprep.subr.mxu0 %v983
    %2172 = vmatpush1.msra.mxu0 %v982
    %2173 = vmatprep.subr.mxu0 %v987
    %2174 = vmatpush1.msra.mxu0 %v986
    %2175 = vmatprep.subr.mxu0 %v991
    %2176 = vmatpush1.msra.mxu0 %v990
    %2177 = vmatprep.subr.mxu0 %v995
    %2178 = vmatpush1.msra.mxu0 %v994
    %2179 = vmatprep.subr.mxu0 %v999
    %2180 = vmatpush1.msra.mxu0 %v998
    %2181 = vmatprep.subr.mxu0 %v1003
    %2182 = vmatpush1.msra.mxu0 %v1002
    %2183 = vmatprep.subr.mxu0 %v1007
    %2184 = vmatpush1.msra.mxu0 %v1006
    %2185 = vmatprep.subr.mxu0 %v1011
    %2186 = vmatpush1.msra.mxu0 %v1010
    %2187 = vmatprep.subr.mxu0 %v1015
    %2188 = vmatpush1.msra.mxu0 %v1014
    %2189 = vmatprep.subr.mxu0 %v1019
    %2190 = vmatpush1.msra.mxu0 %v1018
    %2191 = vmatprep.subr.mxu0 %v1023
    %2192 = vmatpush1.msra.mxu0 %v1022
    %2193 = vmatprep.subr.mxu0 %v1027
    %2194 = vmatpush1.msra.mxu0 %v1026
    %2195 = vmatprep.subr.mxu0 %v1031
    %2196 = vmatpush1.msra.mxu0 %v1030
    %2197 = vmatprep.subr.mxu0 %v1035
    %2198 = vmatpush1.msra.mxu0 %v1034
    %2199 = vmatprep.subr.mxu0 %v1039
    %2200 = vmatpush1.msra.mxu0 %v1038
    %2201 = vmatprep.subr.mxu0 %v1043
    %2202 = vmatpush1.msra.mxu0 %v1042
    %2203 = vmatprep.subr.mxu0 %v1047
    %2204 = vmatpush1.msra.mxu0 %v1046
    %2205 = vmatprep.subr.mxu0 %v1051
    %2206 = vmatpush1.msra.mxu0 %v1050
    %2207 = vmatprep.subr.mxu0 %v1055
    %2208 = vmatpush1.msra.mxu0 %v1054
    %2209 = vmatprep.subr.mxu0 %v1059
    %2210 = vmatpush1.msra.mxu0 %v1058
    %2211 = vmatprep.subr.mxu0 %v1063
    %2212 = vmatpush1.msra.mxu0 %v1062
    %2213 = vmatprep.subr.mxu0 %v1067
    %2214 = vmatpush1.msra.mxu0 %v1066
    %2215 = vmatprep.subr.mxu0 %v1071
    %2216 = vmatpush1.msra.mxu0 %v1070
    %2217 = vmatprep.subr.mxu0 %v1075
    %2218 = vmatpush1.msra.mxu0 %v1074
    %2219 = vmatprep.subr.mxu0 %v1079
    %2220 = vmatpush1.msra.mxu0 %v1078
    %2221 = vmatprep.subr.mxu0 %v1083
    %2222 = vmatpush1.msra.mxu0 %v1082
    %2223 = vmatprep.subr.mxu0 %v1087
    %2224 = vmatpush1.msra.mxu0 %v1086
    %2225 = vmatprep.subr.mxu0 %v1091
    %2226 = vmatpush1.msra.mxu0 %v1090
    %2227 = vmatprep.subr.mxu0 %v1095
    %2228 = vmatpush1.msra.mxu0 %v1094
    %2229 = vmatprep.subr.mxu0 %v1099
    %2230 = vmatpush1.msra.mxu0 %v1098
    %2231 = vmatprep.subr.mxu0 %v1103
    %2232 = vmatpush1.msra.mxu0 %v1102
    %2233 = vmatprep.mubr.f32.mxu0 %v79
    %2234 = vmatmul.mubr.f32.gmra.mrb[0].mxu0 %v78
    %v2235 = vpop.f32.mrb[0].mxu0
    %v2236 = vadd.f32 %v2165, %v2235
    %v2237 = vpop.f32.mrb[0].mxu0
    %v2238 = vadd.f32 %v2167, %v2237
    %2239 = vdwg.mxu0
    %v2240 = vadd.f32 %v60, %v1668
    %v2241 = vadd.f32 %v61, %v1670
    %v2242 = vadd.f32 %v62, %v2236
    %v2243 = vadd.f32 %v63, %v2238
    %2244 = vst [vmem:[#allocation8] sm:$0xff] %v2240
    %2245 = vst [vmem:[#allocation8 + $0x8] sm:$0xff] %v2241
    %2246 = vst [vmem:[#allocation8 + $0x10] sm:$0xff] %v2242
    %2247 = vst [vmem:[#allocation8 + $0x18] sm:$0xff] %v2243
    // Predicated region
    $region30: #{tpu_custom_call.1} parent=1 // pred_check
      %p2248 = pneg %p52
    $region31: #{tpu_custom_call.1} parent=1 // pred_check_branch
      %2250 = sbr.rel (%p2248) target = $region33
    $region32: #{tpu_custom_call.1} parent=1 // pred_region
      %v2251 = vld [vmem:[#allocation8] sm:$0xff]
      %v2252 = vld [vmem:[#allocation8 + $0x8] sm:$0xff]
      %v2253 = vld [vmem:[#allocation8 + $0x10] sm:$0xff]
      %v2254 = vld [vmem:[#allocation8 + $0x18] sm:$0xff]
      %v2255 = vld [vmem:[#allocation7] sm:$0xf]
      %v2257 = vlaneseq
      %v2258 = vshrl.u32 %v2257, 7
      %v2259 = vsub.s32 0, %v2258
      %v2260 = vrot.slane %v2255, %v2259
      %v2261 = vlaneseq
      %v2262 = vshrl.u32 %v2261, 7
      %v2263 = vsub.s32 1, %v2262
      %v2264 = vrot.slane %v2255, %v2263
      %v2265 = vlaneseq
      %v2266 = vshrl.u32 %v2265, 7
      %v2267 = vsub.s32 2, %v2266
      %v2268 = vrot.slane %v2255, %v2267
      %v2269 = vlaneseq
      %v2270 = vshrl.u32 %v2269, 7
      %v2271 = vsub.s32 3, %v2270
      %v2272 = vrot.slane %v2255, %v2271
      %v2277 = vadd.f32 %v2251, %v2260
      %v2278 = vadd.f32 %v2252, %v2264
      %v2279 = vadd.f32 %v2253, %v2268
      %v2280 = vadd.f32 %v2254, %v2272
      %2281 = vst [vmem:[#allocation8] sm:$0xff] %v2277
      %2282 = vst [vmem:[#allocation8 + $0x8] sm:$0xff] %v2278
      %2283 = vst [vmem:[#allocation8 + $0x10] sm:$0xff] %v2279
      %2284 = vst [vmem:[#allocation8 + $0x18] sm:$0xff] %v2280
    $region33: #{tpu_custom_call.1} parent=1 // pred_fallthru
      _
    // Predicated region
    $region34: #{tpu_custom_call.1} parent=1 // pred_check
      _
    $region35: #{tpu_custom_call.1} parent=1 // pred_check_branch
      %2286 = sbr.rel (0) target = $region37
    $region36: #{tpu_custom_call.1} parent=1 // pred_region
      %s2288 = ssub.s32 512, 512
      %2289 = vsyncadd [#allocation4], %s2288
      %s2291 = sshll.u32 [#allocation8], 4
      %s2292 = int_to_ptr.vmem [resolvable:$true] %s2291
      %2294 = dma.vmem_to_hbm [thread:$0]  %s2292, 512, %s3, [#allocation4]
    $region37: #{tpu_custom_call.1} parent=1 // pred_fallthru
      _
    // Predicated region
    $region38: #{tpu_custom_call.1} parent=1 // pred_check
      _
    $region39: #{tpu_custom_call.1} parent=1 // pred_check_branch
      %2296 = sbr.rel (0) target = $region41
    $region40: #{tpu_custom_call.1} parent=1 // pred_region
      %2297 = dma.done [#allocation4], 512
    $region41: #{tpu_custom_call.1} parent=1 // pred_fallthru
      _
    %2298 = vsyncpa [#allocation3], 1
    %2299 = vsyncpa [#allocation6], 1
    %2300 = vsyncpa [#allocation4], 1

</llo_original>
